<compile_context>
chip_gen: v7x
topology: tpu7x:2x2x1
jax: 0.10.0
libtpu: 0.0.40
codegen_flags: <defaults>
</compile_context>

<pallas_src>
import jax
import jax.numpy as jnp
from jax.experimental import pallas as pl
from jax.experimental.pallas import tpu as pltpu

_LANE = 128
_SUBLANE = 8


def _round_up(n, m):
    return ((n + m - 1) // m) * m


def _pad2(a, rows, cols):
    r, c = a.shape
    return jnp.pad(a, ((0, rows - r), (0, cols - c)))


def _vmem_capacity_bytes():
    """Physical VMEM per TensorCore; conservative fallback if the query fails."""
    try:
        info = pltpu.get_tpu_info()
        for attr in ("vmem_capacity_bytes", "vmem_bytes", "vmem_size_bytes"):
            v = getattr(info, attr, None)
            if v:
                return int(v)
    except Exception:
        pass
    return 64 << 20  # v7x per-core VMEM: safe lower bound on every generation


def _vmem_limit_bytes():
    # ~96 MiB on 128-MiB parts (v5e/v6e), ~48 MiB on 64-MiB parts (v7x).
    return max(32 << 20, (_vmem_capacity_bytes() * 3) // 4)


def _pick_batch_tile(B):
    """Target >= 4 grid steps when the batch allows it (>= 2 per TC once
    dimension_semantics=('parallel',) shards across v7x's two TensorCores,
    and enough steps to pipeline x loads / output stores), tiles are
    multiples of 8 (sublane), capped at 1024 rows."""
    if B <= _SUBLANE:
        return B
    tb = (B // 4) // _SUBLANE * _SUBLANE
    if tb < _SUBLANE:
        tb = max(_SUBLANE, (B // 2) // _SUBLANE * _SUBLANE)
    return int(min(1024, max(_SUBLANE, tb)))


def _vmem_estimate_bytes(tb, n_in, n_e1_p, n_z, n_d1_p,
                         x_itemsize, out_itemsize, weight_bufs):
    """Per-step VMEM footprint: double-buffered x tile / output tiles,
    resident weights counted `weight_bufs` times, f32+bf16 live intermediates."""
    bf, f32 = 2, 4
    x_io = 2 * tb * n_in * x_itemsize
    outs = 2 * tb * (n_in + n_z) * out_itemsize
    wts = weight_bufs * bf * (n_in * n_e1_p + n_e1_p * n_z
                              + n_z * n_d1_p + n_d1_p * n_in)
    bias = weight_bufs * f32 * (n_e1_p + n_z + n_d1_p + n_in)
    live = tb * (n_e1_p + n_z + n_d1_p + n_in) * (f32 + bf)
    return x_io + outs + wts + bias + live


def autoencoder_kernel(x_ref,
                       w1_ref, b1_ref,
                       w2_ref, b2_ref,
                       w3_ref, b3_ref,
                       w4_ref, b4_ref,
                       xbar_ref, z_ref):
    """Fused forward pass for one batch tile.  All four matmuls hit the MXU in
    bf16 with f32 accumulation; casts / ReLU / bias adds run on the VPU;
    everything stays VMEM-resident within a grid step."""
    bf16 = jnp.bfloat16
    x = x_ref[...].astype(bf16)                               # in-kernel cast

    # enc_h1 = relu(x @ W1 + b1)
    h1 = jnp.dot(x, w1_ref[...], preferred_element_type=jnp.float32) + b1_ref[...]
    h1 = jnp.maximum(h1, 0.0).astype(bf16)

    # z = h1 @ W2 + b2   (no activation, matches the torch module)
    z = jnp.dot(h1, w2_ref[...], preferred_element_type=jnp.float32) + b2_ref[...]

    # dec_h1 = relu(z @ W3 + b3)
    h2 = jnp.dot(z.astype(bf16), w3_ref[...],
                 preferred_element_type=jnp.float32) + b3_ref[...]
    h2 = jnp.maximum(h2, 0.0).astype(bf16)

    # x_bar = h2 @ W4 + b4
    x_bar = jnp.dot(h2, w4_ref[...],
                    preferred_element_type=jnp.float32) + b4_ref[...]

    xbar_ref[...] = x_bar.astype(xbar_ref.dtype)
    z_ref[...] = z.astype(z_ref.dtype)


def prepare_params(params):
    """One-time (outside the hot path) pad + cast of weights/biases.

    Only the internal hidden dims (n_enc_1, n_dec_1) are zero-padded to 128
    lanes; n_input and n_z keep their natural sizes so x needs no padding and
    the outputs need no slicing.  Zero padding is exact: padded rows/cols
    contribute 0 and relu(0 + 0) = 0 keeps padded hidden columns zero.
    """
    (w1, b1), (w2, b2), (w3, b3), (w4, b4) = params
    n_input, n_enc_1 = w1.shape
    n_z = w2.shape[1]
    n_dec_1 = w3.shape[1]
    assert w2.shape == (n_enc_1, n_z)
    assert w3.shape == (n_z, n_dec_1)
    assert w4.shape == (n_dec_1, n_input)

    n_e1_p = _round_up(n_enc_1, _LANE)
    n_d1_p = _round_up(n_dec_1, _LANE)

    bf16, f32 = jnp.bfloat16, jnp.float32
    w1p = _pad2(w1.astype(bf16), n_input, n_e1_p)
    w2p = _pad2(w2.astype(bf16), n_e1_p, n_z)
    w3p = _pad2(w3.astype(bf16), n_z, n_d1_p)
    w4p = _pad2(w4.astype(bf16), n_d1_p, n_input)
    b1p = _pad2(b1.astype(f32).reshape(1, -1), 1, n_e1_p)
    b2p = b2.astype(f32).reshape(1, -1)
    b3p = _pad2(b3.astype(f32).reshape(1, -1), 1, n_d1_p)
    b4p = b4.astype(f32).reshape(1, -1)

    dims = dict(n_input=n_input, n_enc_1=n_enc_1, n_z=n_z, n_dec_1=n_dec_1,
                n_e1_p=n_e1_p, n_d1_p=n_d1_p)
    return (w1p, b1p, w2p, b2p, w3p, b3p, w4p, b4p), dims


def autoencoder_forward(x, prepared, *, batch_tile=None,
                        single_buffer_weights=True, out_dtype=None):
    """Tiles the batch dim; weights/biases are grid-invariant (same full block
    every step, single-buffered by default) and stay VMEM-resident."""
    flat, dims = prepared
    w1p, b1p, w2p, b2p, w3p, b3p, w4p, b4p = flat
    B, n_input = x.shape
    assert n_input == dims["n_input"]
    n_z = dims["n_z"]
    n_e1_p, n_d1_p = dims["n_e1_p"], dims["n_d1_p"]

    out_dtype = x.dtype if out_dtype is None else out_dtype
    out_itemsize = jnp.dtype(out_dtype).itemsize
    x_itemsize = jnp.dtype(x.dtype).itemsize

    vmem_limit = _vmem_limit_bytes()
    budget = int(vmem_limit * 0.8)
    wbufs = 1 if single_buffer_weights else 2

    tb = _pick_batch_tile(B) if batch_tile is None else batch_tile
    while tb > _SUBLANE and _vmem_estimate_bytes(
            tb, n_input, n_e1_p, n_z, n_d1_p,
            x_itemsize, out_itemsize, wbufs) > budget:
        tb = max(_SUBLANE, (tb // 2) // _SUBLANE * _SUBLANE)
    # TODO(synk): for very wide models whose resident weights alone exceed the
    # VMEM budget, fall back to HBM weights (memory_space=pl.ANY) with a
    # pltpu.emit_pipeline over K/N tiles instead of shrinking the batch tile.

    grid = (pl.cdiv(B, tb),)

    flops = 2 * B * (n_input * dims["n_enc_1"] + dims["n_enc_1"] * n_z
                     + n_z * dims["n_dec_1"] + dims["n_dec_1"] * n_input)
    bytes_accessed = int(
        B * n_input * x_itemsize
        + sum(a.size * a.dtype.itemsize for a in flat)
        + B * (n_input + n_z) * out_itemsize)

    out_shapes = (
        jax.ShapeDtypeStruct((B, n_input), out_dtype),   # x_bar (no padding)
        jax.ShapeDtypeStruct((B, n_z), out_dtype),       # z     (no padding)
    )

    def build(weight_bufs):
        def resident(shape):
            # Constant index_map: block is VMEM-resident across the grid.
            if weight_bufs == 1:
                return pl.BlockSpec(shape, lambda i: (0, 0),
                                    pipeline_mode=pl.Buffered(1))
            return pl.BlockSpec(shape, lambda i: (0, 0))

        return pl.pallas_call(
            autoencoder_kernel,
            out_shape=out_shapes,
            grid_spec=pltpu.PrefetchScalarGridSpec(
                num_scalar_prefetch=0,
                grid=grid,
                in_specs=[
                    pl.BlockSpec((tb, n_input), lambda i: (i, 0)),     # x tile
                    resident((n_input, n_e1_p)), resident((1, n_e1_p)),  # enc_1
                    resident((n_e1_p, n_z)), resident((1, n_z)),         # z_layer
                    resident((n_z, n_d1_p)), resident((1, n_d1_p)),      # dec_1
                    resident((n_d1_p, n_input)), resident((1, n_input)),  # x_bar
                ],
                out_specs=[
                    pl.BlockSpec((tb, n_input), lambda i: (i, 0)),
                    pl.BlockSpec((tb, n_z), lambda i: (i, 0)),
                ],
            ),
            compiler_params=pltpu.CompilerParams(
                dimension_semantics=("parallel",),
                vmem_limit_bytes=vmem_limit),
            cost_estimate=pl.CostEstimate(flops=flops, transcendentals=0,
                                          bytes_accessed=bytes_accessed),
        )

    args = (x, w1p, b1p, w2p, b2p, w3p, b3p, w4p, b4p)
    if wbufs == 1:
        try:
            return build(1)(*args)
        except Exception:
            # pipeline_mode=pl.Buffered(1) not supported by this jax version:
            # fall back to default (double-buffered, still resident) weights.
            return build(2)(*args)
    return build(2)(*args)


def init_params(key, n_input, n_enc_1, n_z, n_dec_1, dtype=jnp.float32):
    """nn.Linear-style U(-1/sqrt(fan_in), 1/sqrt(fan_in)) init; weights are
    returned as (in, out) (pre-transposed vs. PyTorch's (out, in))."""
    dims = [(n_input, n_enc_1), (n_enc_1, n_z), (n_z, n_dec_1), (n_dec_1, n_input)]
    params = []
    for fan_in, fan_out in dims:
        key, kw, kb = jax.random.split(key, 3)
        bound = 1.0 / jnp.sqrt(jnp.array(fan_in, dtype))
        w = jax.random.uniform(kw, (fan_in, fan_out), dtype, -bound, bound)
        b = jax.random.uniform(kb, (fan_out,), dtype, -bound, bound)
        params.append((w, b))
    return params


def reference_forward_f32(x, params):
    (w1, b1), (w2, b2), (w3, b3), (w4, b4) = params
    h1 = jnp.maximum(x @ w1 + b1, 0.0)
    z = h1 @ w2 + b2
    h2 = jnp.maximum(z @ w3 + b3, 0.0)
    x_bar = h2 @ w4 + b4
    return x_bar, z


def reference_forward_bf16(x, params):
    """Same arithmetic as the kernel: bf16 MXU inputs, f32 accumulation."""
    bf16 = jnp.bfloat16
    (w1, b1), (w2, b2), (w3, b3), (w4, b4) = params

    def mm(a, w):
        return jnp.dot(a.astype(bf16), w.astype(bf16),
                       preferred_element_type=jnp.float32)

    h1 = jnp.maximum(mm(x, w1) + b1, 0.0)
    z = mm(h1, w2) + b2
    h2 = jnp.maximum(mm(z, w3) + b3, 0.0)
    x_bar = mm(h2, w4) + b4
    return x_bar, z


if __name__ == "__main__":
    # Small shapes consistent with the module's constructor; batch chosen so
    # the default tiling produces a >= 4-step (pipelined / megacore) grid.
    batch, n_input, n_enc_1, n_z, n_dec_1 = 256, 32, 64, 16, 64

    key = jax.random.PRNGKey(0)
    key, kx = jax.random.split(key)
    x = jax.random.normal(kx, (batch, n_input), jnp.float32)
    params = init_params(key, n_input, n_enc_1, n_z, n_dec_1)

    prepared = prepare_params(params)     # pad + cast once, outside hot path

    x_bar, z = autoencoder_forward(x, prepared)
    jax.block_until_ready((x_bar, z))

    assert x_bar.shape == (batch, n_input) and z.shape == (batch, n_z)

    # Exact-arithmetic reference (bf16 matmul inputs, f32 accumulation).
    xb_ref, z_ref = reference_forward_bf16(x, params)
    assert jnp.allclose(x_bar, xb_ref, atol=1e-3, rtol=1e-3)
    assert jnp.allclose(z, z_ref, atol=1e-3, rtol=1e-3)

    # Sanity check vs. the full-f32 module semantics (bf16 rounding only).
    xb_f32, z_f32 = reference_forward_f32(x, params)
    assert jnp.allclose(x_bar, xb_f32, atol=5e-2, rtol=5e-2)
    assert jnp.allclose(z, z_f32, atol=5e-2, rtol=5e-2)

    print("KERNEL_OK")
</pallas_src>

<mosaic_0001>
module attributes {stable_mosaic.version = 11 : i64} {
  func.func @autoencoder_kernel(%arg0: i32, %arg1: memref<64x32xf32, #tpu.memory_space<vmem>>, %arg2: memref<32x128xbf16, #tpu.memory_space<vmem>>, %arg3: memref<1x128xf32, #tpu.memory_space<vmem>>, %arg4: memref<128x16xbf16, #tpu.memory_space<vmem>>, %arg5: memref<1x16xf32, #tpu.memory_space<vmem>>, %arg6: memref<16x128xbf16, #tpu.memory_space<vmem>>, %arg7: memref<1x128xf32, #tpu.memory_space<vmem>>, %arg8: memref<128x32xbf16, #tpu.memory_space<vmem>>, %arg9: memref<1x32xf32, #tpu.memory_space<vmem>>, %arg10: memref<64x32xf32, #tpu.memory_space<vmem>>, %arg11: memref<64x16xf32, #tpu.memory_space<vmem>>) attributes {dimension_semantics = [#tpu.dimension_semantics<parallel>], iteration_bounds = array<i64: 4>, scalar_prefetch = 0 : i64, scratch_operands = 0 : i64, tpu.core_type = #tpu.core_type<tc>, window_params = [{transform_indices = @transform_0, window_bounds = array<i64: 64, 32>}, {pipeline_mode = #tpu.pipeline_mode<synchronous>, transform_indices = @transform_1, window_bounds = array<i64: 32, 128>}, {pipeline_mode = #tpu.pipeline_mode<synchronous>, transform_indices = @transform_2, window_bounds = array<i64: 1, 128>}, {pipeline_mode = #tpu.pipeline_mode<synchronous>, transform_indices = @transform_3, window_bounds = array<i64: 128, 16>}, {pipeline_mode = #tpu.pipeline_mode<synchronous>, transform_indices = @transform_4, window_bounds = array<i64: 1, 16>}, {pipeline_mode = #tpu.pipeline_mode<synchronous>, transform_indices = @transform_5, window_bounds = array<i64: 16, 128>}, {pipeline_mode = #tpu.pipeline_mode<synchronous>, transform_indices = @transform_6, window_bounds = array<i64: 1, 128>}, {pipeline_mode = #tpu.pipeline_mode<synchronous>, transform_indices = @transform_7, window_bounds = array<i64: 128, 32>}, {pipeline_mode = #tpu.pipeline_mode<synchronous>, transform_indices = @transform_8, window_bounds = array<i64: 1, 32>}, {transform_indices = @transform_9, window_bounds = array<i64: 64, 32>}, {transform_indices = @transform_10, window_bounds = array<i64: 64, 16>}]} {
    %c0 = arith.constant 0 : index
    %c0_0 = arith.constant 0 : index
    %0 = vector.load %arg1[%c0, %c0_0] : memref<64x32xf32, #tpu.memory_space<vmem>>, vector<64x32xf32>
    %1 = arith.truncf %0 : vector<64x32xf32> to vector<64x32xbf16>
    %c0_1 = arith.constant 0 : index
    %c0_2 = arith.constant 0 : index
    %2 = vector.load %arg2[%c0_1, %c0_2] : memref<32x128xbf16, #tpu.memory_space<vmem>>, vector<32x128xbf16>
    %cst = arith.constant dense<0.000000e+00> : vector<64x128xf32>
    %3 = tpu.matmul %1, %2, %cst {dimension_numbers = #tpu.dot_dimension_numbers<[1], [0], [0], [1], [0, 0, 1, 1], [], []>} : vector<64x32xbf16>, vector<32x128xbf16>, vector<64x128xf32> -> vector<64x128xf32>
    %c0_3 = arith.constant 0 : index
    %c0_4 = arith.constant 0 : index
    %4 = vector.load %arg3[%c0_3, %c0_4] : memref<1x128xf32, #tpu.memory_space<vmem>>, vector<1x128xf32>
    %5 = vector.broadcast %4 : vector<1x128xf32> to vector<64x128xf32>
    %6 = arith.addf %3, %5 : vector<64x128xf32>
    %cst_5 = arith.constant 0.000000e+00 : f32
    %7 = vector.broadcast %cst_5 : f32 to vector<64x128xf32>
    %8 = arith.maximumf %6, %7 : vector<64x128xf32>
    %9 = arith.truncf %8 : vector<64x128xf32> to vector<64x128xbf16>
    %c0_6 = arith.constant 0 : index
    %c0_7 = arith.constant 0 : index
    %10 = vector.load %arg4[%c0_6, %c0_7] : memref<128x16xbf16, #tpu.memory_space<vmem>>, vector<128x16xbf16>
    %cst_8 = arith.constant dense<0.000000e+00> : vector<64x16xf32>
    %11 = tpu.matmul %9, %10, %cst_8 {dimension_numbers = #tpu.dot_dimension_numbers<[1], [0], [0], [1], [0, 0, 1, 1], [], []>} : vector<64x128xbf16>, vector<128x16xbf16>, vector<64x16xf32> -> vector<64x16xf32>
    %c0_9 = arith.constant 0 : index
    %c0_10 = arith.constant 0 : index
    %12 = vector.load %arg5[%c0_9, %c0_10] : memref<1x16xf32, #tpu.memory_space<vmem>>, vector<1x16xf32>
    %13 = vector.broadcast %12 : vector<1x16xf32> to vector<64x16xf32>
    %14 = arith.addf %11, %13 : vector<64x16xf32>
    %15 = arith.truncf %14 : vector<64x16xf32> to vector<64x16xbf16>
    %c0_11 = arith.constant 0 : index
    %c0_12 = arith.constant 0 : index
    %16 = vector.load %arg6[%c0_11, %c0_12] : memref<16x128xbf16, #tpu.memory_space<vmem>>, vector<16x128xbf16>
    %cst_13 = arith.constant dense<0.000000e+00> : vector<64x128xf32>
    %17 = tpu.matmul %15, %16, %cst_13 {dimension_numbers = #tpu.dot_dimension_numbers<[1], [0], [0], [1], [0, 0, 1, 1], [], []>} : vector<64x16xbf16>, vector<16x128xbf16>, vector<64x128xf32> -> vector<64x128xf32>
    %c0_14 = arith.constant 0 : index
    %c0_15 = arith.constant 0 : index
    %18 = vector.load %arg7[%c0_14, %c0_15] : memref<1x128xf32, #tpu.memory_space<vmem>>, vector<1x128xf32>
    %19 = vector.broadcast %18 : vector<1x128xf32> to vector<64x128xf32>
    %20 = arith.addf %17, %19 : vector<64x128xf32>
    %cst_16 = arith.constant 0.000000e+00 : f32
    %21 = vector.broadcast %cst_16 : f32 to vector<64x128xf32>
    %22 = arith.maximumf %20, %21 : vector<64x128xf32>
    %23 = arith.truncf %22 : vector<64x128xf32> to vector<64x128xbf16>
    %c0_17 = arith.constant 0 : index
    %c0_18 = arith.constant 0 : index
    %24 = vector.load %arg8[%c0_17, %c0_18] : memref<128x32xbf16, #tpu.memory_space<vmem>>, vector<128x32xbf16>
    %cst_19 = arith.constant dense<0.000000e+00> : vector<64x32xf32>
    %25 = tpu.matmul %23, %24, %cst_19 {dimension_numbers = #tpu.dot_dimension_numbers<[1], [0], [0], [1], [0, 0, 1, 1], [], []>} : vector<64x128xbf16>, vector<128x32xbf16>, vector<64x32xf32> -> vector<64x32xf32>
    %c0_20 = arith.constant 0 : index
    %c0_21 = arith.constant 0 : index
    %26 = vector.load %arg9[%c0_20, %c0_21] : memref<1x32xf32, #tpu.memory_space<vmem>>, vector<1x32xf32>
    %27 = vector.broadcast %26 : vector<1x32xf32> to vector<64x32xf32>
    %28 = arith.addf %25, %27 : vector<64x32xf32>
    %c0_22 = arith.constant 0 : index
    %c0_23 = arith.constant 0 : index
    %29 = vector.load %arg10[%c0_22, %c0_23] : memref<64x32xf32, #tpu.memory_space<vmem>>, vector<64x32xf32>
    tpu.vector_store %arg10[%c0_22, %c0_23], %28 {strides = array<i32>} : memref<64x32xf32, #tpu.memory_space<vmem>>, vector<64x32xf32>,
    %c0_24 = arith.constant 0 : index
    %c0_25 = arith.constant 0 : index
    %30 = vector.load %arg11[%c0_24, %c0_25] : memref<64x16xf32, #tpu.memory_space<vmem>>, vector<64x16xf32>
    tpu.vector_store %arg11[%c0_24, %c0_25], %14 {strides = array<i32>} : memref<64x16xf32, #tpu.memory_space<vmem>>, vector<64x16xf32>,
    return
  }
  func.func @transform_0(%arg0: i32) -> (i32, i32) {
    %c0_i32 = arith.constant 0 : i32
    %c0_i32_0 = arith.constant 0 : i32
    return %arg0, %c0_i32 : i32, i32
  }
  func.func @transform_1(%arg0: i32) -> (i32, i32) {
    %c0_i32 = arith.constant 0 : i32
    %c0_i32_0 = arith.constant 0 : i32
    %c0_i32_1 = arith.constant 0 : i32
    return %c0_i32, %c0_i32_0 : i32, i32
  }
  func.func @transform_2(%arg0: i32) -> (i32, i32) {
    %c0_i32 = arith.constant 0 : i32
    %c0_i32_0 = arith.constant 0 : i32
    %c0_i32_1 = arith.constant 0 : i32
    return %c0_i32, %c0_i32_0 : i32, i32
  }
  func.func @transform_3(%arg0: i32) -> (i32, i32) {
    %c0_i32 = arith.constant 0 : i32
    %c0_i32_0 = arith.constant 0 : i32
    %c0_i32_1 = arith.constant 0 : i32
    return %c0_i32, %c0_i32_0 : i32, i32
  }
  func.func @transform_4(%arg0: i32) -> (i32, i32) {
    %c0_i32 = arith.constant 0 : i32
    %c0_i32_0 = arith.constant 0 : i32
    %c0_i32_1 = arith.constant 0 : i32
    return %c0_i32, %c0_i32_0 : i32, i32
  }
  func.func @transform_5(%arg0: i32) -> (i32, i32) {
    %c0_i32 = arith.constant 0 : i32
    %c0_i32_0 = arith.constant 0 : i32
    %c0_i32_1 = arith.constant 0 : i32
    return %c0_i32, %c0_i32_0 : i32, i32
  }
  func.func @transform_6(%arg0: i32) -> (i32, i32) {
    %c0_i32 = arith.constant 0 : i32
    %c0_i32_0 = arith.constant 0 : i32
    %c0_i32_1 = arith.constant 0 : i32
    return %c0_i32, %c0_i32_0 : i32, i32
  }
  func.func @transform_7(%arg0: i32) -> (i32, i32) {
    %c0_i32 = arith.constant 0 : i32
    %c0_i32_0 = arith.constant 0 : i32
    %c0_i32_1 = arith.constant 0 : i32
    return %c0_i32, %c0_i32_0 : i32, i32
  }
  func.func @transform_8(%arg0: i32) -> (i32, i32) {
    %c0_i32 = arith.constant 0 : i32
    %c0_i32_0 = arith.constant 0 : i32
    %c0_i32_1 = arith.constant 0 : i32
    return %c0_i32, %c0_i32_0 : i32, i32
  }
  func.func @transform_9(%arg0: i32) -> (i32, i32) {
    %c0_i32 = arith.constant 0 : i32
    %c0_i32_0 = arith.constant 0 : i32
    return %arg0, %c0_i32 : i32, i32
  }
  func.func @transform_10(%arg0: i32) -> (i32, i32) {
    %c0_i32 = arith.constant 0 : i32
    %c0_i32_0 = arith.constant 0 : i32
    return %arg0, %c0_i32 : i32, i32
  }
}

module attributes {stable_mosaic.version = 11 : i64} {
  func.func @autoencoder_kernel(%arg0: i32, %arg1: memref<64x32xf32, #tpu.memory_space<vmem>>, %arg2: memref<32x128xbf16, #tpu.memory_space<vmem>>, %arg3: memref<1x128xf32, #tpu.memory_space<vmem>>, %arg4: memref<128x16xbf16, #tpu.memory_space<vmem>>, %arg5: memref<1x16xf32, #tpu.memory_space<vmem>>, %arg6: memref<16x128xbf16, #tpu.memory_space<vmem>>, %arg7: memref<1x128xf32, #tpu.memory_space<vmem>>, %arg8: memref<128x32xbf16, #tpu.memory_space<vmem>>, %arg9: memref<1x32xf32, #tpu.memory_space<vmem>>, %arg10: memref<64x32xf32, #tpu.memory_space<vmem>>, %arg11: memref<64x16xf32, #tpu.memory_space<vmem>>) attributes {dimension_semantics = [#tpu.dimension_semantics<parallel>], iteration_bounds = array<i64: 4>, scalar_prefetch = 0 : i64, scratch_operands = 0 : i64, tpu.core_type = #tpu.core_type<tc>, window_params = [{transform_indices = @transform_0, window_bounds = array<i64: 64, 32>}, {pipeline_mode = #tpu.pipeline_mode<synchronous>, transform_indices = @transform_1, window_bounds = array<i64: 32, 128>}, {pipeline_mode = #tpu.pipeline_mode<synchronous>, transform_indices = @transform_2, window_bounds = array<i64: 1, 128>}, {pipeline_mode = #tpu.pipeline_mode<synchronous>, transform_indices = @transform_3, window_bounds = array<i64: 128, 16>}, {pipeline_mode = #tpu.pipeline_mode<synchronous>, transform_indices = @transform_4, window_bounds = array<i64: 1, 16>}, {pipeline_mode = #tpu.pipeline_mode<synchronous>, transform_indices = @transform_5, window_bounds = array<i64: 16, 128>}, {pipeline_mode = #tpu.pipeline_mode<synchronous>, transform_indices = @transform_6, window_bounds = array<i64: 1, 128>}, {pipeline_mode = #tpu.pipeline_mode<synchronous>, transform_indices = @transform_7, window_bounds = array<i64: 128, 32>}, {pipeline_mode = #tpu.pipeline_mode<synchronous>, transform_indices = @transform_8, window_bounds = array<i64: 1, 32>}, {transform_indices = @transform_9, window_bounds = array<i64: 64, 32>}, {transform_indices = @transform_10, window_bounds = array<i64: 64, 16>}]} {
    %c0 = arith.constant 0 : index
    %c0_0 = arith.constant 0 : index
    %0 = vector.load %arg1[%c0, %c0_0] : memref<64x32xf32, #tpu.memory_space<vmem>>, vector<64x32xf32>
    %1 = arith.truncf %0 : vector<64x32xf32> to vector<64x32xbf16>
    %c0_1 = arith.constant 0 : index
    %c0_2 = arith.constant 0 : index
    %2 = vector.load %arg2[%c0_1, %c0_2] : memref<32x128xbf16, #tpu.memory_space<vmem>>, vector<32x128xbf16>
    %cst = arith.constant dense<0.000000e+00> : vector<64x128xf32>
    %3 = tpu.matmul %1, %2, %cst {dimension_numbers = #tpu.dot_dimension_numbers<[1], [0], [0], [1], [0, 0, 1, 1], [], []>} : vector<64x32xbf16>, vector<32x128xbf16>, vector<64x128xf32> -> vector<64x128xf32>
    %c0_3 = arith.constant 0 : index
    %c0_4 = arith.constant 0 : index
    %4 = vector.load %arg3[%c0_3, %c0_4] : memref<1x128xf32, #tpu.memory_space<vmem>>, vector<1x128xf32>
    %5 = vector.broadcast %4 : vector<1x128xf32> to vector<64x128xf32>
    %6 = arith.addf %3, %5 : vector<64x128xf32>
    %cst_5 = arith.constant 0.000000e+00 : f32
    %7 = vector.broadcast %cst_5 : f32 to vector<64x128xf32>
    %8 = arith.maximumf %6, %7 : vector<64x128xf32>
    %9 = arith.truncf %8 : vector<64x128xf32> to vector<64x128xbf16>
    %c0_6 = arith.constant 0 : index
    %c0_7 = arith.constant 0 : index
    %10 = vector.load %arg4[%c0_6, %c0_7] : memref<128x16xbf16, #tpu.memory_space<vmem>>, vector<128x16xbf16>
    %cst_8 = arith.constant dense<0.000000e+00> : vector<64x16xf32>
    %11 = tpu.matmul %9, %10, %cst_8 {dimension_numbers = #tpu.dot_dimension_numbers<[1], [0], [0], [1], [0, 0, 1, 1], [], []>} : vector<64x128xbf16>, vector<128x16xbf16>, vector<64x16xf32> -> vector<64x16xf32>
    %c0_9 = arith.constant 0 : index
    %c0_10 = arith.constant 0 : index
    %12 = vector.load %arg5[%c0_9, %c0_10] : memref<1x16xf32, #tpu.memory_space<vmem>>, vector<1x16xf32>
    %13 = vector.broadcast %12 : vector<1x16xf32> to vector<64x16xf32>
    %14 = arith.addf %11, %13 : vector<64x16xf32>
    %15 = arith.truncf %14 : vector<64x16xf32> to vector<64x16xbf16>
    %c0_11 = arith.constant 0 : index
    %c0_12 = arith.constant 0 : index
    %16 = vector.load %arg6[%c0_11, %c0_12] : memref<16x128xbf16, #tpu.memory_space<vmem>>, vector<16x128xbf16>
    %cst_13 = arith.constant dense<0.000000e+00> : vector<64x128xf32>
    %17 = tpu.matmul %15, %16, %cst_13 {dimension_numbers = #tpu.dot_dimension_numbers<[1], [0], [0], [1], [0, 0, 1, 1], [], []>} : vector<64x16xbf16>, vector<16x128xbf16>, vector<64x128xf32> -> vector<64x128xf32>
    %c0_14 = arith.constant 0 : index
    %c0_15 = arith.constant 0 : index
    %18 = vector.load %arg7[%c0_14, %c0_15] : memref<1x128xf32, #tpu.memory_space<vmem>>, vector<1x128xf32>
    %19 = vector.broadcast %18 : vector<1x128xf32> to vector<64x128xf32>
    %20 = arith.addf %17, %19 : vector<64x128xf32>
    %cst_16 = arith.constant 0.000000e+00 : f32
    %21 = vector.broadcast %cst_16 : f32 to vector<64x128xf32>
    %22 = arith.maximumf %20, %21 : vector<64x128xf32>
    %23 = arith.truncf %22 : vector<64x128xf32> to vector<64x128xbf16>
    %c0_17 = arith.constant 0 : index
    %c0_18 = arith.constant 0 : index
    %24 = vector.load %arg8[%c0_17, %c0_18] : memref<128x32xbf16, #tpu.memory_space<vmem>>, vector<128x32xbf16>
    %cst_19 = arith.constant dense<0.000000e+00> : vector<64x32xf32>
    %25 = tpu.matmul %23, %24, %cst_19 {dimension_numbers = #tpu.dot_dimension_numbers<[1], [0], [0], [1], [0, 0, 1, 1], [], []>} : vector<64x128xbf16>, vector<128x32xbf16>, vector<64x32xf32> -> vector<64x32xf32>
    %c0_20 = arith.constant 0 : index
    %c0_21 = arith.constant 0 : index
    %26 = vector.load %arg9[%c0_20, %c0_21] : memref<1x32xf32, #tpu.memory_space<vmem>>, vector<1x32xf32>
    %27 = vector.broadcast %26 : vector<1x32xf32> to vector<64x32xf32>
    %28 = arith.addf %25, %27 : vector<64x32xf32>
    %c0_22 = arith.constant 0 : index
    %c0_23 = arith.constant 0 : index
    %29 = vector.load %arg10[%c0_22, %c0_23] : memref<64x32xf32, #tpu.memory_space<vmem>>, vector<64x32xf32>
    tpu.vector_store %arg10[%c0_22, %c0_23], %28 {strides = array<i32>} : memref<64x32xf32, #tpu.memory_space<vmem>>, vector<64x32xf32>,
    %c0_24 = arith.constant 0 : index
    %c0_25 = arith.constant 0 : index
    %30 = vector.load %arg11[%c0_24, %c0_25] : memref<64x16xf32, #tpu.memory_space<vmem>>, vector<64x16xf32>
    tpu.vector_store %arg11[%c0_24, %c0_25], %14 {strides = array<i32>} : memref<64x16xf32, #tpu.memory_space<vmem>>, vector<64x16xf32>,
    return
  }
  func.func @transform_0(%arg0: i32) -> (i32, i32) {
    %c0_i32 = arith.constant 0 : i32
    %c0_i32_0 = arith.constant 0 : i32
    return %arg0, %c0_i32 : i32, i32
  }
  func.func @transform_1(%arg0: i32) -> (i32, i32) {
    %c0_i32 = arith.constant 0 : i32
    %c0_i32_0 = arith.constant 0 : i32
    %c0_i32_1 = arith.constant 0 : i32
    return %c0_i32, %c0_i32_0 : i32, i32
  }
  func.func @transform_2(%arg0: i32) -> (i32, i32) {
    %c0_i32 = arith.constant 0 : i32
    %c0_i32_0 = arith.constant 0 : i32
    %c0_i32_1 = arith.constant 0 : i32
    return %c0_i32, %c0_i32_0 : i32, i32
  }
  func.func @transform_3(%arg0: i32) -> (i32, i32) {
    %c0_i32 = arith.constant 0 : i32
    %c0_i32_0 = arith.constant 0 : i32
    %c0_i32_1 = arith.constant 0 : i32
    return %c0_i32, %c0_i32_0 : i32, i32
  }
  func.func @transform_4(%arg0: i32) -> (i32, i32) {
    %c0_i32 = arith.constant 0 : i32
    %c0_i32_0 = arith.constant 0 : i32
    %c0_i32_1 = arith.constant 0 : i32
    return %c0_i32, %c0_i32_0 : i32, i32
  }
  func.func @transform_5(%arg0: i32) -> (i32, i32) {
    %c0_i32 = arith.constant 0 : i32
    %c0_i32_0 = arith.constant 0 : i32
    %c0_i32_1 = arith.constant 0 : i32
    return %c0_i32, %c0_i32_0 : i32, i32
  }
  func.func @transform_6(%arg0: i32) -> (i32, i32) {
    %c0_i32 = arith.constant 0 : i32
    %c0_i32_0 = arith.constant 0 : i32
    %c0_i32_1 = arith.constant 0 : i32
    return %c0_i32, %c0_i32_0 : i32, i32
  }
  func.func @transform_7(%arg0: i32) -> (i32, i32) {
    %c0_i32 = arith.constant 0 : i32
    %c0_i32_0 = arith.constant 0 : i32
    %c0_i32_1 = arith.constant 0 : i32
    return %c0_i32, %c0_i32_0 : i32, i32
  }
  func.func @transform_8(%arg0: i32) -> (i32, i32) {
    %c0_i32 = arith.constant 0 : i32
    %c0_i32_0 = arith.constant 0 : i32
    %c0_i32_1 = arith.constant 0 : i32
    return %c0_i32, %c0_i32_0 : i32, i32
  }
  func.func @transform_9(%arg0: i32) -> (i32, i32) {
    %c0_i32 = arith.constant 0 : i32
    %c0_i32_0 = arith.constant 0 : i32
    return %arg0, %c0_i32 : i32, i32
  }
  func.func @transform_10(%arg0: i32) -> (i32, i32) {
    %c0_i32 = arith.constant 0 : i32
    %c0_i32_0 = arith.constant 0 : i32
    return %arg0, %c0_i32 : i32, i32
  }
}

</mosaic_0001>

<llo_original>
// kernel: tpu_custom_call.1
$region0: #{tpu_custom_call.1}
  #allocation0 [shape = 'u32[]', space=smem, size = 0x4, offset = 0x4, fixed_abs, tag = 'smem constant byte address 0x4 - core index']
  #allocation1 [shape = 'u32[144,128]{1,0:T(1,128)}', space=vmem, size = 0x12000, scoped, tag = 'internal scratch']
  %s0 = inlined_call_operand.vmem [shape: f32[256,32], index: 0, kind: input, shape index: {}]
  %s1 = inlined_call_operand.vmem [shape: bf16[32,128], index: 1, kind: input, shape index: {}]
  %s2 = inlined_call_operand.vmem [shape: f32[1,128], index: 2, kind: input, shape index: {}]
  %s3 = inlined_call_operand.vmem [shape: bf16[128,16], index: 3, kind: input, shape index: {}]
  %s4 = inlined_call_operand.vmem [shape: f32[1,16], index: 4, kind: input, shape index: {}]
  %s5 = inlined_call_operand.vmem [shape: bf16[16,128], index: 5, kind: input, shape index: {}]
  %s6 = inlined_call_operand.vmem [shape: f32[1,128], index: 6, kind: input, shape index: {}]
  %s7 = inlined_call_operand.vmem [shape: bf16[128,32], index: 7, kind: input, shape index: {}]
  %s8 = inlined_call_operand.vmem [shape: f32[1,32], index: 8, kind: input, shape index: {}]
  %s9 = inlined_call_operand.vmem [shape: f32[256,32], index: 9, kind: output, shape index: {0}]
  %s10 = inlined_call_operand.vmem [shape: f32[256,16], index: 10, kind: output, shape index: {1}]
  %11 = xla_tuple %s9, %s10
  %s12 = sld [smem:[#allocation0]]
  $region77: #{tpu_custom_call.1} parent=0
    _
  %s14 = ssub.s32 1, %s12
  %s15 = scalar_select 0, %s14, %s12
  loop: start=0, step=1, limit=6
  $region2: #{tpu_custom_call.1} parent=0 // loop_pre_header
    _
  $region3: #{tpu_custom_call.1} parent=0 // loop_header
    %s17 = sphi 0, %s21
    %p18 = scmp.ge.s32.totalorder %s17, 6
    %s27 = sphi 0, %s29
    %s30 = sphi 0, %s27
    %s31 = sphi 0, %s30
    %s47 = sphi 0, %s31
    %s51 = sphi 0, %s51
    %s53 = sphi 0, %s51
    %s54 = sphi 0, %s53
    %s68 = sphi 0, %s54
    %s72 = sphi 0, %s72
    %s74 = sphi 0, %s72
    %s75 = sphi 0, %s74
    %s89 = sphi 0, %s75
    %s93 = sphi 0, %s93
    %s95 = sphi 0, %s93
    %s96 = sphi 0, %s95
    %s110 = sphi 0, %s96
    %s114 = sphi 0, %s114
    %s116 = sphi 0, %s114
    %s117 = sphi 0, %s116
    %s131 = sphi 0, %s117
    %s135 = sphi 0, %s135
    %s137 = sphi 0, %s135
    %s138 = sphi 0, %s137
    %s152 = sphi 0, %s138
    %s156 = sphi 0, %s156
    %s158 = sphi 0, %s156
    %s159 = sphi 0, %s158
    %s173 = sphi 0, %s159
    %s177 = sphi 0, %s177
    %s179 = sphi 0, %s177
    %s180 = sphi 0, %s179
    %s194 = sphi 0, %s180
    %s198 = sphi 0, %s198
    %s200 = sphi 0, %s198
    %s201 = sphi 0, %s200
    %s215 = sphi 0, %s201
    %s221 = sphi 0, %s223
    %s224 = sphi 0, %s221
    %s225 = sphi 0, %s224
    %s241 = sphi 0, %s225
    %s247 = sphi 0, %s249
    %s250 = sphi 0, %s247
    %s251 = sphi 0, %s250
    %s267 = sphi 0, %s251
  $region4: #{tpu_custom_call.1} parent=0 // loop_header_branch
    %20 = sbr.rel (%p18) target = $region8
  $region5: #{tpu_custom_call.1} parent=0 // loop_body
    %s22 = ssub.s32 %s17, 1
    %s23 = ssub.s32 %s17, 2
    %s24 = sadd.s32 %s17, 1
    %s25 = ssub.s32 %s17, %s24
    %p26 = scmp.eq.s32.totalorder %s25, 0
    %s28 = sadd.s32 %s27, 1
    %s29 = scalar_select %p26, %s27, %s28
    %p32 = pneg %p26
    %p33 = scmp.eq.s32.totalorder %s17, 3
    %p34 = por %p32, %p33
    %p35 = scmp.ne.s32.totalorder %s27, %s30
    %p36 = scmp.eq.s32.totalorder %s17, 0
    %p37 = por %p35, %p36
    %p38 = scmp.ne.s32.totalorder %s27, %s30
    %p39 = scmp.eq.s32.totalorder %s22, 3
    %p40 = por %p38, %p39
    %p41 = scmp.ne.s32.totalorder %s30, %s31
    %p42 = scmp.eq.s32.totalorder %s22, 0
    %p43 = por %p41, %p42
    %p44 = scmp.ne.s32.totalorder %s30, %s31
    %p45 = scmp.eq.s32.totalorder %s23, 3
    %p46 = por %p44, %p45
    %p48 = scmp.ne.s32.totalorder %s31, %s47
    %p49 = scmp.eq.s32.totalorder %s23, 0
    %p50 = por %p48, %p49
    %s52 = sadd.s32 %s51, 1
    %p55 = scmp.eq.s32.totalorder %s17, 3
    %p56 = scmp.ne.s32.totalorder %s51, %s53
    %p57 = scmp.eq.s32.totalorder %s17, 0
    %p58 = por %p56, %p57
    %p59 = scmp.ne.s32.totalorder %s51, %s53
    %p60 = scmp.eq.s32.totalorder %s22, 3
    %p61 = por %p59, %p60
    %p62 = scmp.ne.s32.totalorder %s53, %s54
    %p63 = scmp.eq.s32.totalorder %s22, 0
    %p64 = por %p62, %p63
    %p65 = scmp.ne.s32.totalorder %s53, %s54
    %p66 = scmp.eq.s32.totalorder %s23, 3
    %p67 = por %p65, %p66
    %p69 = scmp.ne.s32.totalorder %s54, %s68
    %p70 = scmp.eq.s32.totalorder %s23, 0
    %p71 = por %p69, %p70
    %s73 = sadd.s32 %s72, 1
    %p76 = scmp.eq.s32.totalorder %s17, 3
    %p77 = scmp.ne.s32.totalorder %s72, %s74
    %p78 = scmp.eq.s32.totalorder %s17, 0
    %p79 = por %p77, %p78
    %p80 = scmp.ne.s32.totalorder %s72, %s74
    %p81 = scmp.eq.s32.totalorder %s22, 3
    %p82 = por %p80, %p81
    %p83 = scmp.ne.s32.totalorder %s74, %s75
    %p84 = scmp.eq.s32.totalorder %s22, 0
    %p85 = por %p83, %p84
    %p86 = scmp.ne.s32.totalorder %s74, %s75
    %p87 = scmp.eq.s32.totalorder %s23, 3
    %p88 = por %p86, %p87
    %p90 = scmp.ne.s32.totalorder %s75, %s89
    %p91 = scmp.eq.s32.totalorder %s23, 0
    %p92 = por %p90, %p91
    %s94 = sadd.s32 %s93, 1
    %p97 = scmp.eq.s32.totalorder %s17, 3
    %p98 = scmp.ne.s32.totalorder %s93, %s95
    %p99 = scmp.eq.s32.totalorder %s17, 0
    %p100 = por %p98, %p99
    %p101 = scmp.ne.s32.totalorder %s93, %s95
    %p102 = scmp.eq.s32.totalorder %s22, 3
    %p103 = por %p101, %p102
    %p104 = scmp.ne.s32.totalorder %s95, %s96
    %p105 = scmp.eq.s32.totalorder %s22, 0
    %p106 = por %p104, %p105
    %p107 = scmp.ne.s32.totalorder %s95, %s96
    %p108 = scmp.eq.s32.totalorder %s23, 3
    %p109 = por %p107, %p108
    %p111 = scmp.ne.s32.totalorder %s96, %s110
    %p112 = scmp.eq.s32.totalorder %s23, 0
    %p113 = por %p111, %p112
    %s115 = sadd.s32 %s114, 1
    %p118 = scmp.eq.s32.totalorder %s17, 3
    %p119 = scmp.ne.s32.totalorder %s114, %s116
    %p120 = scmp.eq.s32.totalorder %s17, 0
    %p121 = por %p119, %p120
    %p122 = scmp.ne.s32.totalorder %s114, %s116
    %p123 = scmp.eq.s32.totalorder %s22, 3
    %p124 = por %p122, %p123
    %p125 = scmp.ne.s32.totalorder %s116, %s117
    %p126 = scmp.eq.s32.totalorder %s22, 0
    %p127 = por %p125, %p126
    %p128 = scmp.ne.s32.totalorder %s116, %s117
    %p129 = scmp.eq.s32.totalorder %s23, 3
    %p130 = por %p128, %p129
    %p132 = scmp.ne.s32.totalorder %s117, %s131
    %p133 = scmp.eq.s32.totalorder %s23, 0
    %p134 = por %p132, %p133
    %s136 = sadd.s32 %s135, 1
    %p139 = scmp.eq.s32.totalorder %s17, 3
    %p140 = scmp.ne.s32.totalorder %s135, %s137
    %p141 = scmp.eq.s32.totalorder %s17, 0
    %p142 = por %p140, %p141
    %p143 = scmp.ne.s32.totalorder %s135, %s137
    %p144 = scmp.eq.s32.totalorder %s22, 3
    %p145 = por %p143, %p144
    %p146 = scmp.ne.s32.totalorder %s137, %s138
    %p147 = scmp.eq.s32.totalorder %s22, 0
    %p148 = por %p146, %p147
    %p149 = scmp.ne.s32.totalorder %s137, %s138
    %p150 = scmp.eq.s32.totalorder %s23, 3
    %p151 = por %p149, %p150
    %p153 = scmp.ne.s32.totalorder %s138, %s152
    %p154 = scmp.eq.s32.totalorder %s23, 0
    %p155 = por %p153, %p154
    %s157 = sadd.s32 %s156, 1
    %p160 = scmp.eq.s32.totalorder %s17, 3
    %p161 = scmp.ne.s32.totalorder %s156, %s158
    %p162 = scmp.eq.s32.totalorder %s17, 0
    %p163 = por %p161, %p162
    %p164 = scmp.ne.s32.totalorder %s156, %s158
    %p165 = scmp.eq.s32.totalorder %s22, 3
    %p166 = por %p164, %p165
    %p167 = scmp.ne.s32.totalorder %s158, %s159
    %p168 = scmp.eq.s32.totalorder %s22, 0
    %p169 = por %p167, %p168
    %p170 = scmp.ne.s32.totalorder %s158, %s159
    %p171 = scmp.eq.s32.totalorder %s23, 3
    %p172 = por %p170, %p171
    %p174 = scmp.ne.s32.totalorder %s159, %s173
    %p175 = scmp.eq.s32.totalorder %s23, 0
    %p176 = por %p174, %p175
    %s178 = sadd.s32 %s177, 1
    %p181 = scmp.eq.s32.totalorder %s17, 3
    %p182 = scmp.ne.s32.totalorder %s177, %s179
    %p183 = scmp.eq.s32.totalorder %s17, 0
    %p184 = por %p182, %p183
    %p185 = scmp.ne.s32.totalorder %s177, %s179
    %p186 = scmp.eq.s32.totalorder %s22, 3
    %p187 = por %p185, %p186
    %p188 = scmp.ne.s32.totalorder %s179, %s180
    %p189 = scmp.eq.s32.totalorder %s22, 0
    %p190 = por %p188, %p189
    %p191 = scmp.ne.s32.totalorder %s179, %s180
    %p192 = scmp.eq.s32.totalorder %s23, 3
    %p193 = por %p191, %p192
    %p195 = scmp.ne.s32.totalorder %s180, %s194
    %p196 = scmp.eq.s32.totalorder %s23, 0
    %p197 = por %p195, %p196
    %s199 = sadd.s32 %s198, 1
    %p202 = scmp.eq.s32.totalorder %s17, 3
    %p203 = scmp.ne.s32.totalorder %s198, %s200
    %p204 = scmp.eq.s32.totalorder %s17, 0
    %p205 = por %p203, %p204
    %p206 = scmp.ne.s32.totalorder %s198, %s200
    %p207 = scmp.eq.s32.totalorder %s22, 3
    %p208 = por %p206, %p207
    %p209 = scmp.ne.s32.totalorder %s200, %s201
    %p210 = scmp.eq.s32.totalorder %s22, 0
    %p211 = por %p209, %p210
    %p212 = scmp.ne.s32.totalorder %s200, %s201
    %p213 = scmp.eq.s32.totalorder %s23, 3
    %p214 = por %p212, %p213
    %p216 = scmp.ne.s32.totalorder %s201, %s215
    %p217 = scmp.eq.s32.totalorder %s23, 0
    %p218 = por %p216, %p217
    %s219 = ssub.s32 %s17, %s24
    %p220 = scmp.eq.s32.totalorder %s219, 0
    %s222 = sadd.s32 %s221, 1
    %s223 = scalar_select %p220, %s221, %s222
    %p226 = pneg %p220
    %p227 = scmp.eq.s32.totalorder %s17, 3
    %p228 = por %p226, %p227
    %p229 = scmp.ne.s32.totalorder %s221, %s224
    %p230 = scmp.eq.s32.totalorder %s17, 0
    %p231 = por %p229, %p230
    %p232 = scmp.ne.s32.totalorder %s221, %s224
    %p233 = scmp.eq.s32.totalorder %s22, 3
    %p234 = por %p232, %p233
    %p235 = scmp.ne.s32.totalorder %s224, %s225
    %p236 = scmp.eq.s32.totalorder %s22, 0
    %p237 = por %p235, %p236
    %p238 = scmp.ne.s32.totalorder %s224, %s225
    %p239 = scmp.eq.s32.totalorder %s23, 3
    %p240 = por %p238, %p239
    %p242 = scmp.ne.s32.totalorder %s225, %s241
    %p243 = scmp.eq.s32.totalorder %s23, 0
    %p244 = por %p242, %p243
    %s245 = ssub.s32 %s17, %s24
    %p246 = scmp.eq.s32.totalorder %s245, 0
    %s248 = sadd.s32 %s247, 1
    %s249 = scalar_select %p246, %s247, %s248
    %p252 = pneg %p246
    %p253 = scmp.eq.s32.totalorder %s17, 3
    %p254 = por %p252, %p253
    %p255 = scmp.ne.s32.totalorder %s247, %s250
    %p256 = scmp.eq.s32.totalorder %s17, 0
    %p257 = por %p255, %p256
    %p258 = scmp.ne.s32.totalorder %s247, %s250
    %p259 = scmp.eq.s32.totalorder %s22, 3
    %p260 = por %p258, %p259
    %p261 = scmp.ne.s32.totalorder %s250, %s251
    %p262 = scmp.eq.s32.totalorder %s22, 0
    %p263 = por %p261, %p262
    %p264 = scmp.ne.s32.totalorder %s250, %s251
    %p265 = scmp.eq.s32.totalorder %s23, 3
    %p266 = por %p264, %p265
    %p268 = scmp.ne.s32.totalorder %s251, %s267
    %p269 = scmp.eq.s32.totalorder %s23, 0
    %p270 = por %p268, %p269
    %p271 = scmp.le.s32.totalorder 1, %s17
    %p272 = scmp.lt.s32.totalorder %s17, 5
    %p273 = pnand %p271, %p272
    %p274 = pneg %p273
    // Predicated region
    $region9: #{tpu_custom_call.1} parent=5 // pred_check
      _
    $region10: #{tpu_custom_call.1} parent=5 // pred_check_branch
      %276 = sbr.rel (%p273) target = $region12
    $region11: #{tpu_custom_call.1} parent=5 // pred_region
      %s277 = ssub.s32 %s17, 1
      // Predicated region
      $region13: #{tpu_custom_call.1} parent=11 // pred_check
        %p278 = pneg %p64
      $region14: #{tpu_custom_call.1} parent=11 // pred_check_branch
        %280 = sbr.rel (%p278) target = $region16
      $region15: #{tpu_custom_call.1} parent=11 // pred_region
        _
      $region16: #{tpu_custom_call.1} parent=11 // pred_fallthru
        _
      // Predicated region
      $region17: #{tpu_custom_call.1} parent=11 // pred_check
        %p281 = pneg %p85
      $region18: #{tpu_custom_call.1} parent=11 // pred_check_branch
        %283 = sbr.rel (%p281) target = $region20
      $region19: #{tpu_custom_call.1} parent=11 // pred_region
        _
      $region20: #{tpu_custom_call.1} parent=11 // pred_fallthru
        _
      // Predicated region
      $region21: #{tpu_custom_call.1} parent=11 // pred_check
        %p284 = pneg %p106
      $region22: #{tpu_custom_call.1} parent=11 // pred_check_branch
        %286 = sbr.rel (%p284) target = $region24
      $region23: #{tpu_custom_call.1} parent=11 // pred_region
        _
      $region24: #{tpu_custom_call.1} parent=11 // pred_fallthru
        _
      // Predicated region
      $region25: #{tpu_custom_call.1} parent=11 // pred_check
        %p287 = pneg %p127
      $region26: #{tpu_custom_call.1} parent=11 // pred_check_branch
        %289 = sbr.rel (%p287) target = $region28
      $region27: #{tpu_custom_call.1} parent=11 // pred_region
        _
      $region28: #{tpu_custom_call.1} parent=11 // pred_fallthru
        _
      // Predicated region
      $region29: #{tpu_custom_call.1} parent=11 // pred_check
        %p290 = pneg %p148
      $region30: #{tpu_custom_call.1} parent=11 // pred_check_branch
        %292 = sbr.rel (%p290) target = $region32
      $region31: #{tpu_custom_call.1} parent=11 // pred_region
        _
      $region32: #{tpu_custom_call.1} parent=11 // pred_fallthru
        _
      // Predicated region
      $region33: #{tpu_custom_call.1} parent=11 // pred_check
        %p293 = pneg %p169
      $region34: #{tpu_custom_call.1} parent=11 // pred_check_branch
        %295 = sbr.rel (%p293) target = $region36
      $region35: #{tpu_custom_call.1} parent=11 // pred_region
        _
      $region36: #{tpu_custom_call.1} parent=11 // pred_fallthru
        _
      // Predicated region
      $region37: #{tpu_custom_call.1} parent=11 // pred_check
        %p296 = pneg %p190
      $region38: #{tpu_custom_call.1} parent=11 // pred_check_branch
        %298 = sbr.rel (%p296) target = $region40
      $region39: #{tpu_custom_call.1} parent=11 // pred_region
        _
      $region40: #{tpu_custom_call.1} parent=11 // pred_fallthru
        _
      // Predicated region
      $region41: #{tpu_custom_call.1} parent=11 // pred_check
        %p299 = pneg %p211
      $region42: #{tpu_custom_call.1} parent=11 // pred_check_branch
        %301 = sbr.rel (%p299) target = $region44
      $region43: #{tpu_custom_call.1} parent=11 // pred_region
        _
      $region44: #{tpu_custom_call.1} parent=11 // pred_fallthru
        _
    $region12: #{tpu_custom_call.1} parent=5 // pred_fallthru
      _
    %p302 = scmp.lt.s32.totalorder %s17, 4
    // Predicated region
    $region45: #{tpu_custom_call.1} parent=5 // pred_check
      %p303 = pneg %p302
    $region46: #{tpu_custom_call.1} parent=5 // pred_check_branch
      %305 = sbr.rel (%p303) target = $region48
    $region47: #{tpu_custom_call.1} parent=5 // pred_region
      // Predicated region
      $region49: #{tpu_custom_call.1} parent=47 // pred_check
        %p306 = pneg %p37
      $region50: #{tpu_custom_call.1} parent=47 // pred_check_branch
        %308 = sbr.rel (%p306) target = $region52
      $region51: #{tpu_custom_call.1} parent=47 // pred_region
        %s309 = smul.u32 8, %s17
        %p310 = scmp.lt.s32.totalorder %s309, 31
        %s311 = scalar_select %p310, %s309, 31
        %s312 = smul.addr %s311, 8
        %s313 = scalar_lea.vmem %s0, %s312
        %s314 = smul.u32 8, %s17
      $region52: #{tpu_custom_call.1} parent=47 // pred_fallthru
        _
    $region48: #{tpu_custom_call.1} parent=5 // pred_fallthru
      _
    %p315 = scmp.le.s32.totalorder 1, %s17
    %p316 = scmp.lt.s32.totalorder %s17, 5
    %p317 = pnand %p315, %p316
    %p318 = pneg %p317
    // Predicated region
    $region53: #{tpu_custom_call.1} parent=5 // pred_check
      _
    $region54: #{tpu_custom_call.1} parent=5 // pred_check_branch
      %320 = sbr.rel (%p317) target = $region56
    $region55: #{tpu_custom_call.1} parent=5 // pred_region
      %s321 = ssub.s32 %s17, 1
      %s322 = smul.u32 8, %s22
      %p323 = scmp.lt.s32.totalorder %s322, 31
      %s324 = scalar_select %p323, %s322, 31
      %s325 = smul.addr %s324, 8
      %s326 = scalar_lea.vmem %s0, %s325
      %p327 = pneg %p43
      %p328 = pneg %p40
      %p329 = pneg %p64
      %p330 = pneg %p61
      %p331 = pneg %p85
      %p332 = pneg %p82
      %p333 = pneg %p106
      %p334 = pneg %p103
      %p335 = pneg %p127
      %p336 = pneg %p124
      %p337 = pneg %p148
      %p338 = pneg %p145
      %p339 = pneg %p169
      %p340 = pneg %p166
      %p341 = pneg %p190
      %p342 = pneg %p187
      %p343 = pneg %p211
      %p344 = pneg %p208
      %p345 = pneg %p237
      %p346 = pneg %p234
      %s347 = smul.u32 8, %s22
      %p348 = scmp.lt.s32.totalorder %s347, 31
      %s349 = scalar_select %p348, %s347, 31
      %s350 = smul.addr %s349, 8
      %s351 = scalar_lea.vmem %s9, %s350
      %p352 = pneg %p263
      %p353 = pneg %p260
      %s354 = smul.u32 8, %s22
      %p355 = scmp.lt.s32.totalorder %s354, 31
      %s356 = scalar_select %p355, %s354, 31
      %s357 = smul.addr %s356, 8
      %s358 = scalar_lea.vmem %s10, %s357
      %s359 = smul.u32 8, %s22
      %p360 = scmp.lt.s32.totalorder %s359, 31
      %s361 = scalar_select %p360, %s359, 31
      %s362 = smul.addr %s361, 8
      %s363 = scalar_lea.vmem %s0, %s362
      %s364 = smul.u32 8, %s22
      %s365 = smul.u32 8, %s22
      %p366 = scmp.lt.s32.totalorder %s365, 31
      %s367 = scalar_select %p366, %s365, 31
      %s368 = smul.addr %s367, 8
      %s369 = scalar_lea.vmem %s9, %s368
      %s370 = smul.u32 8, %s22
      %s371 = smul.u32 8, %s22
      %p372 = scmp.lt.s32.totalorder %s371, 31
      %s373 = scalar_select %p372, %s371, 31
      %s374 = smul.addr %s373, 8
      %s375 = scalar_lea.vmem %s10, %s374
      %s376 = smul.u32 8, %s22
      %v378 = vld [vmem:[%s363] sm:$0xff]
      %v379 = vld [vmem:[%s363 + $0x8] sm:$0xff]
      %v380 = vld [vmem:[%s363 + $0x10] sm:$0xff]
      %v381 = vld [vmem:[%s363 + $0x18] sm:$0xff]
      %v382 = vld [vmem:[%s363 + $0x20] sm:$0xff]
      %v383 = vld [vmem:[%s363 + $0x28] sm:$0xff]
      %v384 = vld [vmem:[%s363 + $0x30] sm:$0xff]
      %v385 = vld [vmem:[%s363 + $0x38] sm:$0xff]
      %v386 = vpack.c.bf16 %v379, %v378
      %v387 = vpack.c.bf16 %v381, %v380
      %v388 = vpack.c.bf16 %v383, %v382
      %v389 = vpack.c.bf16 %v385, %v384
      %v390 = vld [vmem:[%s1] sm:$0xf]
      %v391 = vld [vmem:[%s1 + $0x4] sm:$0xf]
      %v392 = vld [vmem:[%s1 + $0x8] sm:$0xf]
      %v393 = vld [vmem:[%s1 + $0xc] sm:$0xf]
      %v394 = vld [vmem:[%s2] sm:$0x1]
      %v396 = vlaneseq
      %v397 = vshrl.u32 %v396, 7
      %v398 = vsub.s32 0, %v397
      %v399 = vrot.slane %v394, %v398
      %v405 = vunpack.c.l.b16 %v390
      %v406 = vunpack.c.l.b16 %v391
      %v407 = vunpack.c.l.b16 %v392
      %v408 = vunpack.c.l.b16 %v393
      %v409 = vpack.c.b16 %v406, %v405
      %v410 = vpack.c.b16 %v408, %v407
      %vm413 = vcmask 261120
      %v415 = vsel %vm413, %v386, 0
      %v418 = vsel %vm413, %v387, 0
      %v421 = vsel %vm413, %v388, 0
      %v424 = vsel %vm413, %v389, 0
      %426 = vmatprep.subr.bf16.mxu0 0
      %427 = vmatpush1.bf16.msra.mxu0 %v409
      %428 = vmatprep.subr.bf16.mxu0 0
      %429 = vmatpush1.bf16.msra.mxu0 %v410
      %430 = vmatprep.subr.bf16.mxu0 0
      %431 = vmatpush1.bf16.msra.mxu0 0
      %432 = vmatprep.subr.bf16.mxu0 0
      %433 = vmatpush1.bf16.msra.mxu0 0
      %434 = vmatprep.subr.bf16.mxu0 0
      %435 = vmatpush1.bf16.msra.mxu0 0
      %436 = vmatprep.subr.bf16.mxu0 0
      %437 = vmatpush1.bf16.msra.mxu0 0
      %438 = vmatprep.subr.bf16.mxu0 0
      %439 = vmatpush1.bf16.msra.mxu0 0
      %440 = vmatprep.subr.bf16.mxu0 0
      %441 = vmatpush1.bf16.msra.mxu0 0
      %442 = vmatprep.subr.bf16.mxu0 0
      %443 = vmatpush1.bf16.msra.mxu0 0
      %444 = vmatprep.subr.bf16.mxu0 0
      %445 = vmatpush1.bf16.msra.mxu0 0
      %446 = vmatprep.subr.bf16.mxu0 0
      %447 = vmatpush1.bf16.msra.mxu0 0
      %448 = vmatprep.subr.bf16.mxu0 0
      %449 = vmatpush1.bf16.msra.mxu0 0
      %450 = vmatprep.subr.bf16.mxu0 0
      %451 = vmatpush1.bf16.msra.mxu0 0
      %452 = vmatprep.subr.bf16.mxu0 0
      %453 = vmatpush1.bf16.msra.mxu0 0
      %454 = vmatprep.subr.bf16.mxu0 0
      %455 = vmatpush1.bf16.msra.mxu0 0
      %456 = vmatprep.subr.bf16.mxu0 0
      %457 = vmatpush1.bf16.msra.mxu0 0
      %458 = vmatprep.mubr.bf16.mxu0 0
      %459 = vmatmul.mubr.bf16.gmra.mrb[0].mxu0 %v415
      %v460 = vpop.f32.mrb[0].mxu0
      %v461 = vadd.f32 %v399, %v460
      %v462 = vpop.f32.mrb[0].mxu0
      %v463 = vpop.f32.mrb[0].mxu0
      %v464 = vadd.f32 %v399, %v463
      %v465 = vpop.f32.mrb[0].mxu0
      %466 = vmatprep.mubr.bf16.mxu0 0
      %467 = vmatmul.mubr.bf16.gmra.mrb[0].mxu0 %v418
      %v468 = vpop.f32.mrb[0].mxu0
      %v469 = vadd.f32 %v399, %v468
      %v470 = vpop.f32.mrb[0].mxu0
      %v471 = vpop.f32.mrb[0].mxu0
      %v472 = vadd.f32 %v399, %v471
      %v473 = vpop.f32.mrb[0].mxu0
      %474 = vmatprep.mubr.bf16.mxu0 0
      %475 = vmatmul.mubr.bf16.gmra.mrb[0].mxu0 %v421
      %v476 = vpop.f32.mrb[0].mxu0
      %v477 = vadd.f32 %v399, %v476
      %v478 = vpop.f32.mrb[0].mxu0
      %v479 = vpop.f32.mrb[0].mxu0
      %v480 = vadd.f32 %v399, %v479
      %v481 = vpop.f32.mrb[0].mxu0
      %482 = vmatprep.mubr.bf16.mxu0 0
      %483 = vmatmul.mubr.bf16.gmra.mrb[0].mxu0 %v424
      %v484 = vpop.f32.mrb[0].mxu0
      %v485 = vadd.f32 %v399, %v484
      %v486 = vpop.f32.mrb[0].mxu0
      %v487 = vpop.f32.mrb[0].mxu0
      %v488 = vadd.f32 %v399, %v487
      %v489 = vpop.f32.mrb[0].mxu0
      %490 = vdwg.mxu0
      %v491 = vmax.f32 %v461, 0.0
      %v492 = vmax.f32 %v464, 0.0
      %v493 = vmax.f32 %v469, 0.0
      %v494 = vmax.f32 %v472, 0.0
      %v495 = vmax.f32 %v477, 0.0
      %v496 = vmax.f32 %v480, 0.0
      %v497 = vmax.f32 %v485, 0.0
      %v498 = vmax.f32 %v488, 0.0
      %v499 = vpack.c.bf16 %v492, %v491
      %v500 = vpack.c.bf16 %v494, %v493
      %v501 = vpack.c.bf16 %v496, %v495
      %v502 = vpack.c.bf16 %v498, %v497
      %v503 = vld [vmem:[%s3] sm:$0xf]
      %v504 = vld [vmem:[%s3 + $0x4] sm:$0xf]
      %v505 = vld [vmem:[%s3 + $0x8] sm:$0xf]
      %v506 = vld [vmem:[%s3 + $0xc] sm:$0xf]
      %v507 = vld [vmem:[%s3 + $0x10] sm:$0xf]
      %v508 = vld [vmem:[%s3 + $0x14] sm:$0xf]
      %v509 = vld [vmem:[%s3 + $0x18] sm:$0xf]
      %v510 = vld [vmem:[%s3 + $0x1c] sm:$0xf]
      %v511 = vld [vmem:[%s3 + $0x20] sm:$0xf]
      %v512 = vld [vmem:[%s3 + $0x24] sm:$0xf]
      %v513 = vld [vmem:[%s3 + $0x28] sm:$0xf]
      %v514 = vld [vmem:[%s3 + $0x2c] sm:$0xf]
      %v515 = vld [vmem:[%s3 + $0x30] sm:$0xf]
      %v516 = vld [vmem:[%s3 + $0x34] sm:$0xf]
      %v517 = vld [vmem:[%s3 + $0x38] sm:$0xf]
      %v518 = vld [vmem:[%s3 + $0x3c] sm:$0xf]
      %v519 = vld [vmem:[%s4] sm:$0x1]
      %v521 = vlaneseq
      %v522 = vshrl.u32 %v521, 7
      %v523 = vsub.s32 0, %v522
      %v524 = vrot.slane %v519, %v523
      %v542 = vunpack.c.l.b16 %v503
      %v543 = vunpack.c.l.b16 %v504
      %v544 = vunpack.c.l.b16 %v505
      %v545 = vunpack.c.l.b16 %v506
      %v546 = vunpack.c.l.b16 %v507
      %v547 = vunpack.c.l.b16 %v508
      %v548 = vunpack.c.l.b16 %v509
      %v549 = vunpack.c.l.b16 %v510
      %v550 = vunpack.c.l.b16 %v511
      %v551 = vunpack.c.l.b16 %v512
      %v552 = vunpack.c.l.b16 %v513
      %v553 = vunpack.c.l.b16 %v514
      %v554 = vunpack.c.l.b16 %v515
      %v555 = vunpack.c.l.b16 %v516
      %v556 = vunpack.c.l.b16 %v517
      %v557 = vunpack.c.l.b16 %v518
      %v558 = vpack.c.b16 %v543, %v542
      %v559 = vpack.c.b16 %v545, %v544
      %v560 = vpack.c.b16 %v547, %v546
      %v561 = vpack.c.b16 %v549, %v548
      %v562 = vpack.c.b16 %v551, %v550
      %v563 = vpack.c.b16 %v553, %v552
      %v564 = vpack.c.b16 %v555, %v554
      %v565 = vpack.c.b16 %v557, %v556
      %574 = vmatprep.subr.bf16.mxu0 0
      %575 = vmatpush1.bf16.msra.mxu0 %v558
      %576 = vmatprep.subr.bf16.mxu0 0
      %577 = vmatpush1.bf16.msra.mxu0 %v559
      %578 = vmatprep.subr.bf16.mxu0 0
      %579 = vmatpush1.bf16.msra.mxu0 %v560
      %580 = vmatprep.subr.bf16.mxu0 0
      %581 = vmatpush1.bf16.msra.mxu0 %v561
      %582 = vmatprep.subr.bf16.mxu0 0
      %583 = vmatpush1.bf16.msra.mxu0 %v562
      %584 = vmatprep.subr.bf16.mxu0 0
      %585 = vmatpush1.bf16.msra.mxu0 %v563
      %586 = vmatprep.subr.bf16.mxu0 0
      %587 = vmatpush1.bf16.msra.mxu0 %v564
      %588 = vmatprep.subr.bf16.mxu0 0
      %589 = vmatpush1.bf16.msra.mxu0 %v565
      %590 = vmatprep.subr.bf16.mxu0 0
      %591 = vmatpush1.bf16.msra.mxu0 0
      %592 = vmatprep.subr.bf16.mxu0 0
      %593 = vmatpush1.bf16.msra.mxu0 0
      %594 = vmatprep.subr.bf16.mxu0 0
      %595 = vmatpush1.bf16.msra.mxu0 0
      %596 = vmatprep.subr.bf16.mxu0 0
      %597 = vmatpush1.bf16.msra.mxu0 0
      %598 = vmatprep.subr.bf16.mxu0 0
      %599 = vmatpush1.bf16.msra.mxu0 0
      %600 = vmatprep.subr.bf16.mxu0 0
      %601 = vmatpush1.bf16.msra.mxu0 0
      %602 = vmatprep.subr.bf16.mxu0 0
      %603 = vmatpush1.bf16.msra.mxu0 0
      %604 = vmatprep.subr.bf16.mxu0 0
      %605 = vmatpush1.bf16.msra.mxu0 0
      %606 = vmatprep.mubr.bf16.mxu0 0
      %607 = vmatmul.mubr.bf16.gmra.mrb[0].mxu0 %v499
      %v608 = vpop.f32.mrb[0].mxu0
      %v609 = vadd.f32 %v524, %v608
      %v610 = vpop.f32.mrb[0].mxu0
      %v611 = vpop.f32.mrb[0].mxu0
      %v612 = vadd.f32 %v524, %v611
      %v613 = vpop.f32.mrb[0].mxu0
      %614 = vmatprep.mubr.bf16.mxu0 0
      %615 = vmatmul.mubr.bf16.gmra.mrb[0].mxu0 %v500
      %v616 = vpop.f32.mrb[0].mxu0
      %v617 = vadd.f32 %v524, %v616
      %v618 = vpop.f32.mrb[0].mxu0
      %v619 = vpop.f32.mrb[0].mxu0
      %v620 = vadd.f32 %v524, %v619
      %v621 = vpop.f32.mrb[0].mxu0
      %622 = vmatprep.mubr.bf16.mxu0 0
      %623 = vmatmul.mubr.bf16.gmra.mrb[0].mxu0 %v501
      %v624 = vpop.f32.mrb[0].mxu0
      %v625 = vadd.f32 %v524, %v624
      %v626 = vpop.f32.mrb[0].mxu0
      %v627 = vpop.f32.mrb[0].mxu0
      %v628 = vadd.f32 %v524, %v627
      %v629 = vpop.f32.mrb[0].mxu0
      %630 = vmatprep.mubr.bf16.mxu0 0
      %631 = vmatmul.mubr.bf16.gmra.mrb[0].mxu0 %v502
      %v632 = vpop.f32.mrb[0].mxu0
      %v633 = vadd.f32 %v524, %v632
      %v634 = vpop.f32.mrb[0].mxu0
      %v635 = vpop.f32.mrb[0].mxu0
      %v636 = vadd.f32 %v524, %v635
      %v637 = vpop.f32.mrb[0].mxu0
      %638 = vdwg.mxu0
      %v639 = vpack.c.bf16 %v612, %v609
      %v640 = vpack.c.bf16 %v620, %v617
      %v641 = vpack.c.bf16 %v628, %v625
      %v642 = vpack.c.bf16 %v636, %v633
      %v643 = vld [vmem:[%s5] sm:$0xf]
      %v644 = vld [vmem:[%s5 + $0x4] sm:$0xf]
      %v645 = vld [vmem:[%s6] sm:$0x1]
      %v647 = vlaneseq
      %v648 = vshrl.u32 %v647, 7
      %v649 = vsub.s32 0, %v648
      %v650 = vrot.slane %v645, %v649
      %v654 = vunpack.c.l.b16 %v643
      %v655 = vunpack.c.l.b16 %v644
      %v656 = vpack.c.b16 %v655, %v654
      %vm658 = vcmask 130048
      %v660 = vsel %vm658, %v639, 0
      %v663 = vsel %vm658, %v640, 0
      %v666 = vsel %vm658, %v641, 0
      %v669 = vsel %vm658, %v642, 0
      %671 = vmatprep.subr.bf16.mxu0 0
      %672 = vmatpush1.bf16.msra.mxu0 %v656
      %673 = vmatprep.subr.bf16.mxu0 0
      %674 = vmatpush1.bf16.msra.mxu0 0
      %675 = vmatprep.subr.bf16.mxu0 0
      %676 = vmatpush1.bf16.msra.mxu0 0
      %677 = vmatprep.subr.bf16.mxu0 0
      %678 = vmatpush1.bf16.msra.mxu0 0
      %679 = vmatprep.subr.bf16.mxu0 0
      %680 = vmatpush1.bf16.msra.mxu0 0
      %681 = vmatprep.subr.bf16.mxu0 0
      %682 = vmatpush1.bf16.msra.mxu0 0
      %683 = vmatprep.subr.bf16.mxu0 0
      %684 = vmatpush1.bf16.msra.mxu0 0
      %685 = vmatprep.subr.bf16.mxu0 0
      %686 = vmatpush1.bf16.msra.mxu0 0
      %687 = vmatprep.subr.bf16.mxu0 0
      %688 = vmatpush1.bf16.msra.mxu0 0
      %689 = vmatprep.subr.bf16.mxu0 0
      %690 = vmatpush1.bf16.msra.mxu0 0
      %691 = vmatprep.subr.bf16.mxu0 0
      %692 = vmatpush1.bf16.msra.mxu0 0
      %693 = vmatprep.subr.bf16.mxu0 0
      %694 = vmatpush1.bf16.msra.mxu0 0
      %695 = vmatprep.subr.bf16.mxu0 0
      %696 = vmatpush1.bf16.msra.mxu0 0
      %697 = vmatprep.subr.bf16.mxu0 0
      %698 = vmatpush1.bf16.msra.mxu0 0
      %699 = vmatprep.subr.bf16.mxu0 0
      %700 = vmatpush1.bf16.msra.mxu0 0
      %701 = vmatprep.subr.bf16.mxu0 0
      %702 = vmatpush1.bf16.msra.mxu0 0
      %703 = vmatprep.mubr.bf16.mxu0 0
      %704 = vmatmul.mubr.bf16.gmra.mrb[0].mxu0 %v660
      %v705 = vpop.f32.mrb[0].mxu0
      %v706 = vadd.f32 %v650, %v705
      %v707 = vpop.f32.mrb[0].mxu0
      %v708 = vpop.f32.mrb[0].mxu0
      %v709 = vadd.f32 %v650, %v708
      %v710 = vpop.f32.mrb[0].mxu0
      %711 = vmatprep.mubr.bf16.mxu0 0
      %712 = vmatmul.mubr.bf16.gmra.mrb[0].mxu0 %v663
      %v713 = vpop.f32.mrb[0].mxu0
      %v714 = vadd.f32 %v650, %v713
      %v715 = vpop.f32.mrb[0].mxu0
      %v716 = vpop.f32.mrb[0].mxu0
      %v717 = vadd.f32 %v650, %v716
      %v718 = vpop.f32.mrb[0].mxu0
      %719 = vmatprep.mubr.bf16.mxu0 0
      %720 = vmatmul.mubr.bf16.gmra.mrb[0].mxu0 %v666
      %v721 = vpop.f32.mrb[0].mxu0
      %v722 = vadd.f32 %v650, %v721
      %v723 = vpop.f32.mrb[0].mxu0
      %v724 = vpop.f32.mrb[0].mxu0
      %v725 = vadd.f32 %v650, %v724
      %v726 = vpop.f32.mrb[0].mxu0
      %727 = vmatprep.mubr.bf16.mxu0 0
      %728 = vmatmul.mubr.bf16.gmra.mrb[0].mxu0 %v669
      %v729 = vpop.f32.mrb[0].mxu0
      %v730 = vadd.f32 %v650, %v729
      %v731 = vpop.f32.mrb[0].mxu0
      %v732 = vpop.f32.mrb[0].mxu0
      %v733 = vadd.f32 %v650, %v732
      %v734 = vpop.f32.mrb[0].mxu0
      %735 = vdwg.mxu0
      %v736 = vmax.f32 %v706, 0.0
      %v737 = vmax.f32 %v709, 0.0
      %v738 = vmax.f32 %v714, 0.0
      %v739 = vmax.f32 %v717, 0.0
      %v740 = vmax.f32 %v722, 0.0
      %v741 = vmax.f32 %v725, 0.0
      %v742 = vmax.f32 %v730, 0.0
      %v743 = vmax.f32 %v733, 0.0
      %v744 = vpack.c.bf16 %v737, %v736
      %v745 = vpack.c.bf16 %v739, %v738
      %v746 = vpack.c.bf16 %v741, %v740
      %v747 = vpack.c.bf16 %v743, %v742
      %v748 = vld [vmem:[%s7] sm:$0xf]
      %v749 = vld [vmem:[%s7 + $0x4] sm:$0xf]
      %v750 = vld [vmem:[%s7 + $0x8] sm:$0xf]
      %v751 = vld [vmem:[%s7 + $0xc] sm:$0xf]
      %v752 = vld [vmem:[%s7 + $0x10] sm:$0xf]
      %v753 = vld [vmem:[%s7 + $0x14] sm:$0xf]
      %v754 = vld [vmem:[%s7 + $0x18] sm:$0xf]
      %v755 = vld [vmem:[%s7 + $0x1c] sm:$0xf]
      %v756 = vld [vmem:[%s7 + $0x20] sm:$0xf]
      %v757 = vld [vmem:[%s7 + $0x24] sm:$0xf]
      %v758 = vld [vmem:[%s7 + $0x28] sm:$0xf]
      %v759 = vld [vmem:[%s7 + $0x2c] sm:$0xf]
      %v760 = vld [vmem:[%s7 + $0x30] sm:$0xf]
      %v761 = vld [vmem:[%s7 + $0x34] sm:$0xf]
      %v762 = vld [vmem:[%s7 + $0x38] sm:$0xf]
      %v763 = vld [vmem:[%s7 + $0x3c] sm:$0xf]
      %v764 = vld [vmem:[%s8] sm:$0x1]
      %v766 = vlaneseq
      %v767 = vshrl.u32 %v766, 7
      %v768 = vsub.s32 0, %v767
      %v769 = vrot.slane %v764, %v768
      %v787 = vunpack.c.l.b16 %v748
      %v788 = vunpack.c.l.b16 %v749
      %v789 = vunpack.c.l.b16 %v750
      %v790 = vunpack.c.l.b16 %v751
      %v791 = vunpack.c.l.b16 %v752
      %v792 = vunpack.c.l.b16 %v753
      %v793 = vunpack.c.l.b16 %v754
      %v794 = vunpack.c.l.b16 %v755
      %v795 = vunpack.c.l.b16 %v756
      %v796 = vunpack.c.l.b16 %v757
      %v797 = vunpack.c.l.b16 %v758
      %v798 = vunpack.c.l.b16 %v759
      %v799 = vunpack.c.l.b16 %v760
      %v800 = vunpack.c.l.b16 %v761
      %v801 = vunpack.c.l.b16 %v762
      %v802 = vunpack.c.l.b16 %v763
      %v803 = vpack.c.b16 %v788, %v787
      %v804 = vpack.c.b16 %v790, %v789
      %v805 = vpack.c.b16 %v792, %v791
      %v806 = vpack.c.b16 %v794, %v793
      %v807 = vpack.c.b16 %v796, %v795
      %v808 = vpack.c.b16 %v798, %v797
      %v809 = vpack.c.b16 %v800, %v799
      %v810 = vpack.c.b16 %v802, %v801
      %819 = vmatprep.subr.bf16.mxu0 0
      %820 = vmatpush1.bf16.msra.mxu0 %v803
      %821 = vmatprep.subr.bf16.mxu0 0
      %822 = vmatpush1.bf16.msra.mxu0 %v804
      %823 = vmatprep.subr.bf16.mxu0 0
      %824 = vmatpush1.bf16.msra.mxu0 %v805
      %825 = vmatprep.subr.bf16.mxu0 0
      %826 = vmatpush1.bf16.msra.mxu0 %v806
      %827 = vmatprep.subr.bf16.mxu0 0
      %828 = vmatpush1.bf16.msra.mxu0 %v807
      %829 = vmatprep.subr.bf16.mxu0 0
      %830 = vmatpush1.bf16.msra.mxu0 %v808
      %831 = vmatprep.subr.bf16.mxu0 0
      %832 = vmatpush1.bf16.msra.mxu0 %v809
      %833 = vmatprep.subr.bf16.mxu0 0
      %834 = vmatpush1.bf16.msra.mxu0 %v810
      %835 = vmatprep.subr.bf16.mxu0 0
      %836 = vmatpush1.bf16.msra.mxu0 0
      %837 = vmatprep.subr.bf16.mxu0 0
      %838 = vmatpush1.bf16.msra.mxu0 0
      %839 = vmatprep.subr.bf16.mxu0 0
      %840 = vmatpush1.bf16.msra.mxu0 0
      %841 = vmatprep.subr.bf16.mxu0 0
      %842 = vmatpush1.bf16.msra.mxu0 0
      %843 = vmatprep.subr.bf16.mxu0 0
      %844 = vmatpush1.bf16.msra.mxu0 0
      %845 = vmatprep.subr.bf16.mxu0 0
      %846 = vmatpush1.bf16.msra.mxu0 0
      %847 = vmatprep.subr.bf16.mxu0 0
      %848 = vmatpush1.bf16.msra.mxu0 0
      %849 = vmatprep.subr.bf16.mxu0 0
      %850 = vmatpush1.bf16.msra.mxu0 0
      %851 = vmatprep.mubr.bf16.mxu0 0
      %852 = vmatmul.mubr.bf16.gmra.mrb[0].mxu0 %v744
      %v853 = vpop.f32.mrb[0].mxu0
      %v854 = vadd.f32 %v769, %v853
      %v855 = vpop.f32.mrb[0].mxu0
      %v856 = vpop.f32.mrb[0].mxu0
      %v857 = vadd.f32 %v769, %v856
      %v858 = vpop.f32.mrb[0].mxu0
      %859 = vmatprep.mubr.bf16.mxu0 0
      %860 = vmatmul.mubr.bf16.gmra.mrb[0].mxu0 %v745
      %v861 = vpop.f32.mrb[0].mxu0
      %v862 = vadd.f32 %v769, %v861
      %v863 = vpop.f32.mrb[0].mxu0
      %v864 = vpop.f32.mrb[0].mxu0
      %v865 = vadd.f32 %v769, %v864
      %v866 = vpop.f32.mrb[0].mxu0
      %867 = vmatprep.mubr.bf16.mxu0 0
      %868 = vmatmul.mubr.bf16.gmra.mrb[0].mxu0 %v746
      %v869 = vpop.f32.mrb[0].mxu0
      %v870 = vadd.f32 %v769, %v869
      %v871 = vpop.f32.mrb[0].mxu0
      %v872 = vpop.f32.mrb[0].mxu0
      %v873 = vadd.f32 %v769, %v872
      %v874 = vpop.f32.mrb[0].mxu0
      %875 = vmatprep.mubr.bf16.mxu0 0
      %876 = vmatmul.mubr.bf16.gmra.mrb[0].mxu0 %v747
      %v877 = vpop.f32.mrb[0].mxu0
      %v878 = vadd.f32 %v769, %v877
      %v879 = vpop.f32.mrb[0].mxu0
      %v880 = vpop.f32.mrb[0].mxu0
      %v881 = vadd.f32 %v769, %v880
      %v882 = vpop.f32.mrb[0].mxu0
      %883 = vdwg.mxu0
      %884 = vst.msk [vmem:[%s369] sm:$0xff] %vm413, %v854
      %885 = vst.msk [vmem:[%s369 + $0x8] sm:$0xff] %vm413, %v857
      %886 = vst.msk [vmem:[%s369 + $0x10] sm:$0xff] %vm413, %v862
      %887 = vst.msk [vmem:[%s369 + $0x18] sm:$0xff] %vm413, %v865
      %888 = vst.msk [vmem:[%s369 + $0x20] sm:$0xff] %vm413, %v870
      %889 = vst.msk [vmem:[%s369 + $0x28] sm:$0xff] %vm413, %v873
      %890 = vst.msk [vmem:[%s369 + $0x30] sm:$0xff] %vm413, %v878
      %891 = vst.msk [vmem:[%s369 + $0x38] sm:$0xff] %vm413, %v881
      %892 = vst.msk [vmem:[%s375] sm:$0xff] %vm658, %v609
      %893 = vst.msk [vmem:[%s375 + $0x8] sm:$0xff] %vm658, %v612
      %894 = vst.msk [vmem:[%s375 + $0x10] sm:$0xff] %vm658, %v617
      %895 = vst.msk [vmem:[%s375 + $0x18] sm:$0xff] %vm658, %v620
      %896 = vst.msk [vmem:[%s375 + $0x20] sm:$0xff] %vm658, %v625
      %897 = vst.msk [vmem:[%s375 + $0x28] sm:$0xff] %vm658, %v628
      %898 = vst.msk [vmem:[%s375 + $0x30] sm:$0xff] %vm658, %v633
      %899 = vst.msk [vmem:[%s375 + $0x38] sm:$0xff] %vm658, %v636
      %s900 = smul.u32 8, %s22
      %p901 = scmp.lt.s32.totalorder %s900, 31
      %s902 = scalar_select %p901, %s900, 31
      %s903 = smul.addr %s902, 8
      %s904 = scalar_lea.vmem %s9, %s903
      %s905 = smul.u32 8, %s22
      %p906 = scmp.lt.s32.totalorder %s905, 31
      %s907 = scalar_select %p906, %s905, 31
      %s908 = smul.addr %s907, 8
      %s909 = scalar_lea.vmem %s10, %s908
      // Predicated region
      $region57: #{tpu_custom_call.1} parent=55 // pred_check
        %p910 = pneg %p234
      $region58: #{tpu_custom_call.1} parent=55 // pred_check_branch
        %912 = sbr.rel (%p910) target = $region60
      $region59: #{tpu_custom_call.1} parent=55 // pred_region
        %s913 = smul.u32 8, %s22
      $region60: #{tpu_custom_call.1} parent=55 // pred_fallthru
        _
      // Predicated region
      $region61: #{tpu_custom_call.1} parent=55 // pred_check
        %p914 = pneg %p260
      $region62: #{tpu_custom_call.1} parent=55 // pred_check_branch
        %916 = sbr.rel (%p914) target = $region64
      $region63: #{tpu_custom_call.1} parent=55 // pred_region
        %s917 = smul.u32 8, %s22
      $region64: #{tpu_custom_call.1} parent=55 // pred_fallthru
        _
    $region56: #{tpu_custom_call.1} parent=5 // pred_fallthru
      _
    %p918 = scmp.le.s32.totalorder 2, %s17
    // Predicated region
    $region65: #{tpu_custom_call.1} parent=5 // pred_check
      %p919 = pneg %p918
    $region66: #{tpu_custom_call.1} parent=5 // pred_check_branch
      %921 = sbr.rel (%p919) target = $region68
    $region67: #{tpu_custom_call.1} parent=5 // pred_region
      %s922 = ssub.s32 %s17, 2
      // Predicated region
      $region69: #{tpu_custom_call.1} parent=67 // pred_check
        %p923 = pneg %p240
      $region70: #{tpu_custom_call.1} parent=67 // pred_check_branch
        %925 = sbr.rel (%p923) target = $region72
      $region71: #{tpu_custom_call.1} parent=67 // pred_region
        %s926 = smul.u32 8, %s23
        %p927 = scmp.lt.s32.totalorder %s926, 31
        %s928 = scalar_select %p927, %s926, 31
        %s929 = smul.addr %s928, 8
        %s930 = scalar_lea.vmem %s9, %s929
      $region72: #{tpu_custom_call.1} parent=67 // pred_fallthru
        _
      // Predicated region
      $region73: #{tpu_custom_call.1} parent=67 // pred_check
        %p931 = pneg %p266
      $region74: #{tpu_custom_call.1} parent=67 // pred_check_branch
        %933 = sbr.rel (%p931) target = $region76
      $region75: #{tpu_custom_call.1} parent=67 // pred_region
        %s934 = smul.u32 8, %s23
        %p935 = scmp.lt.s32.totalorder %s934, 31
        %s936 = scalar_select %p935, %s934, 31
        %s937 = smul.addr %s936, 8
        %s938 = scalar_lea.vmem %s10, %s937
      $region76: #{tpu_custom_call.1} parent=67 // pred_fallthru
        _
    $region68: #{tpu_custom_call.1} parent=5 // pred_fallthru
      _
  $region6: #{tpu_custom_call.1} parent=0 // loop_footer
    %s21 = sadd.s32 1, %s17
  $region7: #{tpu_custom_call.1} parent=0 // loop_footer_branch
    %16 = sbr.rel target = $region3
  $region8: #{tpu_custom_call.1} parent=0 // loop_exit
    _

// kernel: tpu_custom_call.1
$region0: #{tpu_custom_call.1}
  #allocation0 [shape = 'u32[]', space=smem, size = 0x4, offset = 0x4, fixed_abs, tag = 'smem constant byte address 0x4 - core index']
  #allocation1 [shape = 'u32[144,128]{1,0:T(1,128)}', space=vmem, size = 0x12000, scoped, tag = 'internal scratch']
  %s0 = inlined_call_operand.vmem [shape: f32[256,32], index: 0, kind: input, shape index: {}]
  %s1 = inlined_call_operand.vmem [shape: bf16[32,128], index: 1, kind: input, shape index: {}]
  %s2 = inlined_call_operand.vmem [shape: f32[1,128], index: 2, kind: input, shape index: {}]
  %s3 = inlined_call_operand.vmem [shape: bf16[128,16], index: 3, kind: input, shape index: {}]
  %s4 = inlined_call_operand.vmem [shape: f32[1,16], index: 4, kind: input, shape index: {}]
  %s5 = inlined_call_operand.vmem [shape: bf16[16,128], index: 5, kind: input, shape index: {}]
  %s6 = inlined_call_operand.vmem [shape: f32[1,128], index: 6, kind: input, shape index: {}]
  %s7 = inlined_call_operand.vmem [shape: bf16[128,32], index: 7, kind: input, shape index: {}]
  %s8 = inlined_call_operand.vmem [shape: f32[1,32], index: 8, kind: input, shape index: {}]
  %s9 = inlined_call_operand.vmem [shape: f32[256,32], index: 9, kind: output, shape index: {0}]
  %s10 = inlined_call_operand.vmem [shape: f32[256,16], index: 10, kind: output, shape index: {1}]
  %11 = xla_tuple %s9, %s10
  %s12 = sld [smem:[#allocation0]]
  $region77: #{tpu_custom_call.1} parent=0
    _
  %s14 = ssub.s32 1, %s12
  %s15 = scalar_select 0, %s14, %s12
  loop: start=0, step=1, limit=6
  $region2: #{tpu_custom_call.1} parent=0 // loop_pre_header
    _
  $region3: #{tpu_custom_call.1} parent=0 // loop_header
    %s17 = sphi 0, %s21
    %p18 = scmp.ge.s32.totalorder %s17, 6
    %s27 = sphi 0, %s29
    %s30 = sphi 0, %s27
    %s31 = sphi 0, %s30
    %s47 = sphi 0, %s31
    %s51 = sphi 0, %s51
    %s53 = sphi 0, %s51
    %s54 = sphi 0, %s53
    %s68 = sphi 0, %s54
    %s72 = sphi 0, %s72
    %s74 = sphi 0, %s72
    %s75 = sphi 0, %s74
    %s89 = sphi 0, %s75
    %s93 = sphi 0, %s93
    %s95 = sphi 0, %s93
    %s96 = sphi 0, %s95
    %s110 = sphi 0, %s96
    %s114 = sphi 0, %s114
    %s116 = sphi 0, %s114
    %s117 = sphi 0, %s116
    %s131 = sphi 0, %s117
    %s135 = sphi 0, %s135
    %s137 = sphi 0, %s135
    %s138 = sphi 0, %s137
    %s152 = sphi 0, %s138
    %s156 = sphi 0, %s156
    %s158 = sphi 0, %s156
    %s159 = sphi 0, %s158
    %s173 = sphi 0, %s159
    %s177 = sphi 0, %s177
    %s179 = sphi 0, %s177
    %s180 = sphi 0, %s179
    %s194 = sphi 0, %s180
    %s198 = sphi 0, %s198
    %s200 = sphi 0, %s198
    %s201 = sphi 0, %s200
    %s215 = sphi 0, %s201
    %s221 = sphi 0, %s223
    %s224 = sphi 0, %s221
    %s225 = sphi 0, %s224
    %s241 = sphi 0, %s225
    %s247 = sphi 0, %s249
    %s250 = sphi 0, %s247
    %s251 = sphi 0, %s250
    %s267 = sphi 0, %s251
  $region4: #{tpu_custom_call.1} parent=0 // loop_header_branch
    %20 = sbr.rel (%p18) target = $region8
  $region5: #{tpu_custom_call.1} parent=0 // loop_body
    %s22 = ssub.s32 %s17, 1
    %s23 = ssub.s32 %s17, 2
    %s24 = sadd.s32 %s17, 1
    %s25 = ssub.s32 %s17, %s24
    %p26 = scmp.eq.s32.totalorder %s25, 0
    %s28 = sadd.s32 %s27, 1
    %s29 = scalar_select %p26, %s27, %s28
    %p32 = pneg %p26
    %p33 = scmp.eq.s32.totalorder %s17, 3
    %p34 = por %p32, %p33
    %p35 = scmp.ne.s32.totalorder %s27, %s30
    %p36 = scmp.eq.s32.totalorder %s17, 0
    %p37 = por %p35, %p36
    %p38 = scmp.ne.s32.totalorder %s27, %s30
    %p39 = scmp.eq.s32.totalorder %s22, 3
    %p40 = por %p38, %p39
    %p41 = scmp.ne.s32.totalorder %s30, %s31
    %p42 = scmp.eq.s32.totalorder %s22, 0
    %p43 = por %p41, %p42
    %p44 = scmp.ne.s32.totalorder %s30, %s31
    %p45 = scmp.eq.s32.totalorder %s23, 3
    %p46 = por %p44, %p45
    %p48 = scmp.ne.s32.totalorder %s31, %s47
    %p49 = scmp.eq.s32.totalorder %s23, 0
    %p50 = por %p48, %p49
    %s52 = sadd.s32 %s51, 1
    %p55 = scmp.eq.s32.totalorder %s17, 3
    %p56 = scmp.ne.s32.totalorder %s51, %s53
    %p57 = scmp.eq.s32.totalorder %s17, 0
    %p58 = por %p56, %p57
    %p59 = scmp.ne.s32.totalorder %s51, %s53
    %p60 = scmp.eq.s32.totalorder %s22, 3
    %p61 = por %p59, %p60
    %p62 = scmp.ne.s32.totalorder %s53, %s54
    %p63 = scmp.eq.s32.totalorder %s22, 0
    %p64 = por %p62, %p63
    %p65 = scmp.ne.s32.totalorder %s53, %s54
    %p66 = scmp.eq.s32.totalorder %s23, 3
    %p67 = por %p65, %p66
    %p69 = scmp.ne.s32.totalorder %s54, %s68
    %p70 = scmp.eq.s32.totalorder %s23, 0
    %p71 = por %p69, %p70
    %s73 = sadd.s32 %s72, 1
    %p76 = scmp.eq.s32.totalorder %s17, 3
    %p77 = scmp.ne.s32.totalorder %s72, %s74
    %p78 = scmp.eq.s32.totalorder %s17, 0
    %p79 = por %p77, %p78
    %p80 = scmp.ne.s32.totalorder %s72, %s74
    %p81 = scmp.eq.s32.totalorder %s22, 3
    %p82 = por %p80, %p81
    %p83 = scmp.ne.s32.totalorder %s74, %s75
    %p84 = scmp.eq.s32.totalorder %s22, 0
    %p85 = por %p83, %p84
    %p86 = scmp.ne.s32.totalorder %s74, %s75
    %p87 = scmp.eq.s32.totalorder %s23, 3
    %p88 = por %p86, %p87
    %p90 = scmp.ne.s32.totalorder %s75, %s89
    %p91 = scmp.eq.s32.totalorder %s23, 0
    %p92 = por %p90, %p91
    %s94 = sadd.s32 %s93, 1
    %p97 = scmp.eq.s32.totalorder %s17, 3
    %p98 = scmp.ne.s32.totalorder %s93, %s95
    %p99 = scmp.eq.s32.totalorder %s17, 0
    %p100 = por %p98, %p99
    %p101 = scmp.ne.s32.totalorder %s93, %s95
    %p102 = scmp.eq.s32.totalorder %s22, 3
    %p103 = por %p101, %p102
    %p104 = scmp.ne.s32.totalorder %s95, %s96
    %p105 = scmp.eq.s32.totalorder %s22, 0
    %p106 = por %p104, %p105
    %p107 = scmp.ne.s32.totalorder %s95, %s96
    %p108 = scmp.eq.s32.totalorder %s23, 3
    %p109 = por %p107, %p108
    %p111 = scmp.ne.s32.totalorder %s96, %s110
    %p112 = scmp.eq.s32.totalorder %s23, 0
    %p113 = por %p111, %p112
    %s115 = sadd.s32 %s114, 1
    %p118 = scmp.eq.s32.totalorder %s17, 3
    %p119 = scmp.ne.s32.totalorder %s114, %s116
    %p120 = scmp.eq.s32.totalorder %s17, 0
    %p121 = por %p119, %p120
    %p122 = scmp.ne.s32.totalorder %s114, %s116
    %p123 = scmp.eq.s32.totalorder %s22, 3
    %p124 = por %p122, %p123
    %p125 = scmp.ne.s32.totalorder %s116, %s117
    %p126 = scmp.eq.s32.totalorder %s22, 0
    %p127 = por %p125, %p126
    %p128 = scmp.ne.s32.totalorder %s116, %s117
    %p129 = scmp.eq.s32.totalorder %s23, 3
    %p130 = por %p128, %p129
    %p132 = scmp.ne.s32.totalorder %s117, %s131
    %p133 = scmp.eq.s32.totalorder %s23, 0
    %p134 = por %p132, %p133
    %s136 = sadd.s32 %s135, 1
    %p139 = scmp.eq.s32.totalorder %s17, 3
    %p140 = scmp.ne.s32.totalorder %s135, %s137
    %p141 = scmp.eq.s32.totalorder %s17, 0
    %p142 = por %p140, %p141
    %p143 = scmp.ne.s32.totalorder %s135, %s137
    %p144 = scmp.eq.s32.totalorder %s22, 3
    %p145 = por %p143, %p144
    %p146 = scmp.ne.s32.totalorder %s137, %s138
    %p147 = scmp.eq.s32.totalorder %s22, 0
    %p148 = por %p146, %p147
    %p149 = scmp.ne.s32.totalorder %s137, %s138
    %p150 = scmp.eq.s32.totalorder %s23, 3
    %p151 = por %p149, %p150
    %p153 = scmp.ne.s32.totalorder %s138, %s152
    %p154 = scmp.eq.s32.totalorder %s23, 0
    %p155 = por %p153, %p154
    %s157 = sadd.s32 %s156, 1
    %p160 = scmp.eq.s32.totalorder %s17, 3
    %p161 = scmp.ne.s32.totalorder %s156, %s158
    %p162 = scmp.eq.s32.totalorder %s17, 0
    %p163 = por %p161, %p162
    %p164 = scmp.ne.s32.totalorder %s156, %s158
    %p165 = scmp.eq.s32.totalorder %s22, 3
    %p166 = por %p164, %p165
    %p167 = scmp.ne.s32.totalorder %s158, %s159
    %p168 = scmp.eq.s32.totalorder %s22, 0
    %p169 = por %p167, %p168
    %p170 = scmp.ne.s32.totalorder %s158, %s159
    %p171 = scmp.eq.s32.totalorder %s23, 3
    %p172 = por %p170, %p171
    %p174 = scmp.ne.s32.totalorder %s159, %s173
    %p175 = scmp.eq.s32.totalorder %s23, 0
    %p176 = por %p174, %p175
    %s178 = sadd.s32 %s177, 1
    %p181 = scmp.eq.s32.totalorder %s17, 3
    %p182 = scmp.ne.s32.totalorder %s177, %s179
    %p183 = scmp.eq.s32.totalorder %s17, 0
    %p184 = por %p182, %p183
    %p185 = scmp.ne.s32.totalorder %s177, %s179
    %p186 = scmp.eq.s32.totalorder %s22, 3
    %p187 = por %p185, %p186
    %p188 = scmp.ne.s32.totalorder %s179, %s180
    %p189 = scmp.eq.s32.totalorder %s22, 0
    %p190 = por %p188, %p189
    %p191 = scmp.ne.s32.totalorder %s179, %s180
    %p192 = scmp.eq.s32.totalorder %s23, 3
    %p193 = por %p191, %p192
    %p195 = scmp.ne.s32.totalorder %s180, %s194
    %p196 = scmp.eq.s32.totalorder %s23, 0
    %p197 = por %p195, %p196
    %s199 = sadd.s32 %s198, 1
    %p202 = scmp.eq.s32.totalorder %s17, 3
    %p203 = scmp.ne.s32.totalorder %s198, %s200
    %p204 = scmp.eq.s32.totalorder %s17, 0
    %p205 = por %p203, %p204
    %p206 = scmp.ne.s32.totalorder %s198, %s200
    %p207 = scmp.eq.s32.totalorder %s22, 3
    %p208 = por %p206, %p207
    %p209 = scmp.ne.s32.totalorder %s200, %s201
    %p210 = scmp.eq.s32.totalorder %s22, 0
    %p211 = por %p209, %p210
    %p212 = scmp.ne.s32.totalorder %s200, %s201
    %p213 = scmp.eq.s32.totalorder %s23, 3
    %p214 = por %p212, %p213
    %p216 = scmp.ne.s32.totalorder %s201, %s215
    %p217 = scmp.eq.s32.totalorder %s23, 0
    %p218 = por %p216, %p217
    %s219 = ssub.s32 %s17, %s24
    %p220 = scmp.eq.s32.totalorder %s219, 0
    %s222 = sadd.s32 %s221, 1
    %s223 = scalar_select %p220, %s221, %s222
    %p226 = pneg %p220
    %p227 = scmp.eq.s32.totalorder %s17, 3
    %p228 = por %p226, %p227
    %p229 = scmp.ne.s32.totalorder %s221, %s224
    %p230 = scmp.eq.s32.totalorder %s17, 0
    %p231 = por %p229, %p230
    %p232 = scmp.ne.s32.totalorder %s221, %s224
    %p233 = scmp.eq.s32.totalorder %s22, 3
    %p234 = por %p232, %p233
    %p235 = scmp.ne.s32.totalorder %s224, %s225
    %p236 = scmp.eq.s32.totalorder %s22, 0
    %p237 = por %p235, %p236
    %p238 = scmp.ne.s32.totalorder %s224, %s225
    %p239 = scmp.eq.s32.totalorder %s23, 3
    %p240 = por %p238, %p239
    %p242 = scmp.ne.s32.totalorder %s225, %s241
    %p243 = scmp.eq.s32.totalorder %s23, 0
    %p244 = por %p242, %p243
    %s245 = ssub.s32 %s17, %s24
    %p246 = scmp.eq.s32.totalorder %s245, 0
    %s248 = sadd.s32 %s247, 1
    %s249 = scalar_select %p246, %s247, %s248
    %p252 = pneg %p246
    %p253 = scmp.eq.s32.totalorder %s17, 3
    %p254 = por %p252, %p253
    %p255 = scmp.ne.s32.totalorder %s247, %s250
    %p256 = scmp.eq.s32.totalorder %s17, 0
    %p257 = por %p255, %p256
    %p258 = scmp.ne.s32.totalorder %s247, %s250
    %p259 = scmp.eq.s32.totalorder %s22, 3
    %p260 = por %p258, %p259
    %p261 = scmp.ne.s32.totalorder %s250, %s251
    %p262 = scmp.eq.s32.totalorder %s22, 0
    %p263 = por %p261, %p262
    %p264 = scmp.ne.s32.totalorder %s250, %s251
    %p265 = scmp.eq.s32.totalorder %s23, 3
    %p266 = por %p264, %p265
    %p268 = scmp.ne.s32.totalorder %s251, %s267
    %p269 = scmp.eq.s32.totalorder %s23, 0
    %p270 = por %p268, %p269
    %p271 = scmp.le.s32.totalorder 1, %s17
    %p272 = scmp.lt.s32.totalorder %s17, 5
    %p273 = pnand %p271, %p272
    %p274 = pneg %p273
    // Predicated region
    $region9: #{tpu_custom_call.1} parent=5 // pred_check
      _
    $region10: #{tpu_custom_call.1} parent=5 // pred_check_branch
      %276 = sbr.rel (%p273) target = $region12
    $region11: #{tpu_custom_call.1} parent=5 // pred_region
      %s277 = ssub.s32 %s17, 1
      // Predicated region
      $region13: #{tpu_custom_call.1} parent=11 // pred_check
        %p278 = pneg %p64
      $region14: #{tpu_custom_call.1} parent=11 // pred_check_branch
        %280 = sbr.rel (%p278) target = $region16
      $region15: #{tpu_custom_call.1} parent=11 // pred_region
        _
      $region16: #{tpu_custom_call.1} parent=11 // pred_fallthru
        _
      // Predicated region
      $region17: #{tpu_custom_call.1} parent=11 // pred_check
        %p281 = pneg %p85
      $region18: #{tpu_custom_call.1} parent=11 // pred_check_branch
        %283 = sbr.rel (%p281) target = $region20
      $region19: #{tpu_custom_call.1} parent=11 // pred_region
        _
      $region20: #{tpu_custom_call.1} parent=11 // pred_fallthru
        _
      // Predicated region
      $region21: #{tpu_custom_call.1} parent=11 // pred_check
        %p284 = pneg %p106
      $region22: #{tpu_custom_call.1} parent=11 // pred_check_branch
        %286 = sbr.rel (%p284) target = $region24
      $region23: #{tpu_custom_call.1} parent=11 // pred_region
        _
      $region24: #{tpu_custom_call.1} parent=11 // pred_fallthru
        _
      // Predicated region
      $region25: #{tpu_custom_call.1} parent=11 // pred_check
        %p287 = pneg %p127
      $region26: #{tpu_custom_call.1} parent=11 // pred_check_branch
        %289 = sbr.rel (%p287) target = $region28
      $region27: #{tpu_custom_call.1} parent=11 // pred_region
        _
      $region28: #{tpu_custom_call.1} parent=11 // pred_fallthru
        _
      // Predicated region
      $region29: #{tpu_custom_call.1} parent=11 // pred_check
        %p290 = pneg %p148
      $region30: #{tpu_custom_call.1} parent=11 // pred_check_branch
        %292 = sbr.rel (%p290) target = $region32
      $region31: #{tpu_custom_call.1} parent=11 // pred_region
        _
      $region32: #{tpu_custom_call.1} parent=11 // pred_fallthru
        _
      // Predicated region
      $region33: #{tpu_custom_call.1} parent=11 // pred_check
        %p293 = pneg %p169
      $region34: #{tpu_custom_call.1} parent=11 // pred_check_branch
        %295 = sbr.rel (%p293) target = $region36
      $region35: #{tpu_custom_call.1} parent=11 // pred_region
        _
      $region36: #{tpu_custom_call.1} parent=11 // pred_fallthru
        _
      // Predicated region
      $region37: #{tpu_custom_call.1} parent=11 // pred_check
        %p296 = pneg %p190
      $region38: #{tpu_custom_call.1} parent=11 // pred_check_branch
        %298 = sbr.rel (%p296) target = $region40
      $region39: #{tpu_custom_call.1} parent=11 // pred_region
        _
      $region40: #{tpu_custom_call.1} parent=11 // pred_fallthru
        _
      // Predicated region
      $region41: #{tpu_custom_call.1} parent=11 // pred_check
        %p299 = pneg %p211
      $region42: #{tpu_custom_call.1} parent=11 // pred_check_branch
        %301 = sbr.rel (%p299) target = $region44
      $region43: #{tpu_custom_call.1} parent=11 // pred_region
        _
      $region44: #{tpu_custom_call.1} parent=11 // pred_fallthru
        _
    $region12: #{tpu_custom_call.1} parent=5 // pred_fallthru
      _
    %p302 = scmp.lt.s32.totalorder %s17, 4
    // Predicated region
    $region45: #{tpu_custom_call.1} parent=5 // pred_check
      %p303 = pneg %p302
    $region46: #{tpu_custom_call.1} parent=5 // pred_check_branch
      %305 = sbr.rel (%p303) target = $region48
    $region47: #{tpu_custom_call.1} parent=5 // pred_region
      // Predicated region
      $region49: #{tpu_custom_call.1} parent=47 // pred_check
        %p306 = pneg %p37
      $region50: #{tpu_custom_call.1} parent=47 // pred_check_branch
        %308 = sbr.rel (%p306) target = $region52
      $region51: #{tpu_custom_call.1} parent=47 // pred_region
        %s309 = smul.u32 8, %s17
        %p310 = scmp.lt.s32.totalorder %s309, 31
        %s311 = scalar_select %p310, %s309, 31
        %s312 = smul.addr %s311, 8
        %s313 = scalar_lea.vmem %s0, %s312
        %s314 = smul.u32 8, %s17
      $region52: #{tpu_custom_call.1} parent=47 // pred_fallthru
        _
    $region48: #{tpu_custom_call.1} parent=5 // pred_fallthru
      _
    %p315 = scmp.le.s32.totalorder 1, %s17
    %p316 = scmp.lt.s32.totalorder %s17, 5
    %p317 = pnand %p315, %p316
    %p318 = pneg %p317
    // Predicated region
    $region53: #{tpu_custom_call.1} parent=5 // pred_check
      _
    $region54: #{tpu_custom_call.1} parent=5 // pred_check_branch
      %320 = sbr.rel (%p317) target = $region56
    $region55: #{tpu_custom_call.1} parent=5 // pred_region
      %s321 = ssub.s32 %s17, 1
      %s322 = smul.u32 8, %s22
      %p323 = scmp.lt.s32.totalorder %s322, 31
      %s324 = scalar_select %p323, %s322, 31
      %s325 = smul.addr %s324, 8
      %s326 = scalar_lea.vmem %s0, %s325
      %p327 = pneg %p43
      %p328 = pneg %p40
      %p329 = pneg %p64
      %p330 = pneg %p61
      %p331 = pneg %p85
      %p332 = pneg %p82
      %p333 = pneg %p106
      %p334 = pneg %p103
      %p335 = pneg %p127
      %p336 = pneg %p124
      %p337 = pneg %p148
      %p338 = pneg %p145
      %p339 = pneg %p169
      %p340 = pneg %p166
      %p341 = pneg %p190
      %p342 = pneg %p187
      %p343 = pneg %p211
      %p344 = pneg %p208
      %p345 = pneg %p237
      %p346 = pneg %p234
      %s347 = smul.u32 8, %s22
      %p348 = scmp.lt.s32.totalorder %s347, 31
      %s349 = scalar_select %p348, %s347, 31
      %s350 = smul.addr %s349, 8
      %s351 = scalar_lea.vmem %s9, %s350
      %p352 = pneg %p263
      %p353 = pneg %p260
      %s354 = smul.u32 8, %s22
      %p355 = scmp.lt.s32.totalorder %s354, 31
      %s356 = scalar_select %p355, %s354, 31
      %s357 = smul.addr %s356, 8
      %s358 = scalar_lea.vmem %s10, %s357
      %s359 = smul.u32 8, %s22
      %p360 = scmp.lt.s32.totalorder %s359, 31
      %s361 = scalar_select %p360, %s359, 31
      %s362 = smul.addr %s361, 8
      %s363 = scalar_lea.vmem %s0, %s362
      %s364 = smul.u32 8, %s22
      %s365 = smul.u32 8, %s22
      %p366 = scmp.lt.s32.totalorder %s365, 31
      %s367 = scalar_select %p366, %s365, 31
      %s368 = smul.addr %s367, 8
      %s369 = scalar_lea.vmem %s9, %s368
      %s370 = smul.u32 8, %s22
      %s371 = smul.u32 8, %s22
      %p372 = scmp.lt.s32.totalorder %s371, 31
      %s373 = scalar_select %p372, %s371, 31
      %s374 = smul.addr %s373, 8
      %s375 = scalar_lea.vmem %s10, %s374
      %s376 = smul.u32 8, %s22
      %v378 = vld [vmem:[%s363] sm:$0xff]
      %v379 = vld [vmem:[%s363 + $0x8] sm:$0xff]
      %v380 = vld [vmem:[%s363 + $0x10] sm:$0xff]
      %v381 = vld [vmem:[%s363 + $0x18] sm:$0xff]
      %v382 = vld [vmem:[%s363 + $0x20] sm:$0xff]
      %v383 = vld [vmem:[%s363 + $0x28] sm:$0xff]
      %v384 = vld [vmem:[%s363 + $0x30] sm:$0xff]
      %v385 = vld [vmem:[%s363 + $0x38] sm:$0xff]
      %v386 = vpack.c.bf16 %v379, %v378
      %v387 = vpack.c.bf16 %v381, %v380
      %v388 = vpack.c.bf16 %v383, %v382
      %v389 = vpack.c.bf16 %v385, %v384
      %v390 = vld [vmem:[%s1] sm:$0xf]
      %v391 = vld [vmem:[%s1 + $0x4] sm:$0xf]
      %v392 = vld [vmem:[%s1 + $0x8] sm:$0xf]
      %v393 = vld [vmem:[%s1 + $0xc] sm:$0xf]
      %v394 = vld [vmem:[%s2] sm:$0x1]
      %v396 = vlaneseq
      %v397 = vshrl.u32 %v396, 7
      %v398 = vsub.s32 0, %v397
      %v399 = vrot.slane %v394, %v398
      %v405 = vunpack.c.l.b16 %v390
      %v406 = vunpack.c.l.b16 %v391
      %v407 = vunpack.c.l.b16 %v392
      %v408 = vunpack.c.l.b16 %v393
      %v409 = vpack.c.b16 %v406, %v405
      %v410 = vpack.c.b16 %v408, %v407
      %vm413 = vcmask 261120
      %v415 = vsel %vm413, %v386, 0
      %v418 = vsel %vm413, %v387, 0
      %v421 = vsel %vm413, %v388, 0
      %v424 = vsel %vm413, %v389, 0
      %426 = vmatprep.subr.bf16.mxu0 0
      %427 = vmatpush1.bf16.msra.mxu0 %v409
      %428 = vmatprep.subr.bf16.mxu0 0
      %429 = vmatpush1.bf16.msra.mxu0 %v410
      %430 = vmatprep.subr.bf16.mxu0 0
      %431 = vmatpush1.bf16.msra.mxu0 0
      %432 = vmatprep.subr.bf16.mxu0 0
      %433 = vmatpush1.bf16.msra.mxu0 0
      %434 = vmatprep.subr.bf16.mxu0 0
      %435 = vmatpush1.bf16.msra.mxu0 0
      %436 = vmatprep.subr.bf16.mxu0 0
      %437 = vmatpush1.bf16.msra.mxu0 0
      %438 = vmatprep.subr.bf16.mxu0 0
      %439 = vmatpush1.bf16.msra.mxu0 0
      %440 = vmatprep.subr.bf16.mxu0 0
      %441 = vmatpush1.bf16.msra.mxu0 0
      %442 = vmatprep.subr.bf16.mxu0 0
      %443 = vmatpush1.bf16.msra.mxu0 0
      %444 = vmatprep.subr.bf16.mxu0 0
      %445 = vmatpush1.bf16.msra.mxu0 0
      %446 = vmatprep.subr.bf16.mxu0 0
      %447 = vmatpush1.bf16.msra.mxu0 0
      %448 = vmatprep.subr.bf16.mxu0 0
      %449 = vmatpush1.bf16.msra.mxu0 0
      %450 = vmatprep.subr.bf16.mxu0 0
      %451 = vmatpush1.bf16.msra.mxu0 0
      %452 = vmatprep.subr.bf16.mxu0 0
      %453 = vmatpush1.bf16.msra.mxu0 0
      %454 = vmatprep.subr.bf16.mxu0 0
      %455 = vmatpush1.bf16.msra.mxu0 0
      %456 = vmatprep.subr.bf16.mxu0 0
      %457 = vmatpush1.bf16.msra.mxu0 0
      %458 = vmatprep.mubr.bf16.mxu0 0
      %459 = vmatmul.mubr.bf16.gmra.mrb[0].mxu0 %v415
      %v460 = vpop.f32.mrb[0].mxu0
      %v461 = vadd.f32 %v399, %v460
      %v462 = vpop.f32.mrb[0].mxu0
      %v463 = vpop.f32.mrb[0].mxu0
      %v464 = vadd.f32 %v399, %v463
      %v465 = vpop.f32.mrb[0].mxu0
      %466 = vmatprep.mubr.bf16.mxu0 0
      %467 = vmatmul.mubr.bf16.gmra.mrb[0].mxu0 %v418
      %v468 = vpop.f32.mrb[0].mxu0
      %v469 = vadd.f32 %v399, %v468
      %v470 = vpop.f32.mrb[0].mxu0
      %v471 = vpop.f32.mrb[0].mxu0
      %v472 = vadd.f32 %v399, %v471
      %v473 = vpop.f32.mrb[0].mxu0
      %474 = vmatprep.mubr.bf16.mxu0 0
      %475 = vmatmul.mubr.bf16.gmra.mrb[0].mxu0 %v421
      %v476 = vpop.f32.mrb[0].mxu0
      %v477 = vadd.f32 %v399, %v476
      %v478 = vpop.f32.mrb[0].mxu0
      %v479 = vpop.f32.mrb[0].mxu0
      %v480 = vadd.f32 %v399, %v479
      %v481 = vpop.f32.mrb[0].mxu0
      %482 = vmatprep.mubr.bf16.mxu0 0
      %483 = vmatmul.mubr.bf16.gmra.mrb[0].mxu0 %v424
      %v484 = vpop.f32.mrb[0].mxu0
      %v485 = vadd.f32 %v399, %v484
      %v486 = vpop.f32.mrb[0].mxu0
      %v487 = vpop.f32.mrb[0].mxu0
      %v488 = vadd.f32 %v399, %v487
      %v489 = vpop.f32.mrb[0].mxu0
      %490 = vdwg.mxu0
      %v491 = vmax.f32 %v461, 0.0
      %v492 = vmax.f32 %v464, 0.0
      %v493 = vmax.f32 %v469, 0.0
      %v494 = vmax.f32 %v472, 0.0
      %v495 = vmax.f32 %v477, 0.0
      %v496 = vmax.f32 %v480, 0.0
      %v497 = vmax.f32 %v485, 0.0
      %v498 = vmax.f32 %v488, 0.0
      %v499 = vpack.c.bf16 %v492, %v491
      %v500 = vpack.c.bf16 %v494, %v493
      %v501 = vpack.c.bf16 %v496, %v495
      %v502 = vpack.c.bf16 %v498, %v497
      %v503 = vld [vmem:[%s3] sm:$0xf]
      %v504 = vld [vmem:[%s3 + $0x4] sm:$0xf]
      %v505 = vld [vmem:[%s3 + $0x8] sm:$0xf]
      %v506 = vld [vmem:[%s3 + $0xc] sm:$0xf]
      %v507 = vld [vmem:[%s3 + $0x10] sm:$0xf]
      %v508 = vld [vmem:[%s3 + $0x14] sm:$0xf]
      %v509 = vld [vmem:[%s3 + $0x18] sm:$0xf]
      %v510 = vld [vmem:[%s3 + $0x1c] sm:$0xf]
      %v511 = vld [vmem:[%s3 + $0x20] sm:$0xf]
      %v512 = vld [vmem:[%s3 + $0x24] sm:$0xf]
      %v513 = vld [vmem:[%s3 + $0x28] sm:$0xf]
      %v514 = vld [vmem:[%s3 + $0x2c] sm:$0xf]
      %v515 = vld [vmem:[%s3 + $0x30] sm:$0xf]
      %v516 = vld [vmem:[%s3 + $0x34] sm:$0xf]
      %v517 = vld [vmem:[%s3 + $0x38] sm:$0xf]
      %v518 = vld [vmem:[%s3 + $0x3c] sm:$0xf]
      %v519 = vld [vmem:[%s4] sm:$0x1]
      %v521 = vlaneseq
      %v522 = vshrl.u32 %v521, 7
      %v523 = vsub.s32 0, %v522
      %v524 = vrot.slane %v519, %v523
      %v542 = vunpack.c.l.b16 %v503
      %v543 = vunpack.c.l.b16 %v504
      %v544 = vunpack.c.l.b16 %v505
      %v545 = vunpack.c.l.b16 %v506
      %v546 = vunpack.c.l.b16 %v507
      %v547 = vunpack.c.l.b16 %v508
      %v548 = vunpack.c.l.b16 %v509
      %v549 = vunpack.c.l.b16 %v510
      %v550 = vunpack.c.l.b16 %v511
      %v551 = vunpack.c.l.b16 %v512
      %v552 = vunpack.c.l.b16 %v513
      %v553 = vunpack.c.l.b16 %v514
      %v554 = vunpack.c.l.b16 %v515
      %v555 = vunpack.c.l.b16 %v516
      %v556 = vunpack.c.l.b16 %v517
      %v557 = vunpack.c.l.b16 %v518
      %v558 = vpack.c.b16 %v543, %v542
      %v559 = vpack.c.b16 %v545, %v544
      %v560 = vpack.c.b16 %v547, %v546
      %v561 = vpack.c.b16 %v549, %v548
      %v562 = vpack.c.b16 %v551, %v550
      %v563 = vpack.c.b16 %v553, %v552
      %v564 = vpack.c.b16 %v555, %v554
      %v565 = vpack.c.b16 %v557, %v556
      %574 = vmatprep.subr.bf16.mxu0 0
      %575 = vmatpush1.bf16.msra.mxu0 %v558
      %576 = vmatprep.subr.bf16.mxu0 0
      %577 = vmatpush1.bf16.msra.mxu0 %v559
      %578 = vmatprep.subr.bf16.mxu0 0
      %579 = vmatpush1.bf16.msra.mxu0 %v560
      %580 = vmatprep.subr.bf16.mxu0 0
      %581 = vmatpush1.bf16.msra.mxu0 %v561
      %582 = vmatprep.subr.bf16.mxu0 0
      %583 = vmatpush1.bf16.msra.mxu0 %v562
      %584 = vmatprep.subr.bf16.mxu0 0
      %585 = vmatpush1.bf16.msra.mxu0 %v563
      %586 = vmatprep.subr.bf16.mxu0 0
      %587 = vmatpush1.bf16.msra.mxu0 %v564
      %588 = vmatprep.subr.bf16.mxu0 0
      %589 = vmatpush1.bf16.msra.mxu0 %v565
      %590 = vmatprep.subr.bf16.mxu0 0
      %591 = vmatpush1.bf16.msra.mxu0 0
      %592 = vmatprep.subr.bf16.mxu0 0
      %593 = vmatpush1.bf16.msra.mxu0 0
      %594 = vmatprep.subr.bf16.mxu0 0
      %595 = vmatpush1.bf16.msra.mxu0 0
      %596 = vmatprep.subr.bf16.mxu0 0
      %597 = vmatpush1.bf16.msra.mxu0 0
      %598 = vmatprep.subr.bf16.mxu0 0
      %599 = vmatpush1.bf16.msra.mxu0 0
      %600 = vmatprep.subr.bf16.mxu0 0
      %601 = vmatpush1.bf16.msra.mxu0 0
      %602 = vmatprep.subr.bf16.mxu0 0
      %603 = vmatpush1.bf16.msra.mxu0 0
      %604 = vmatprep.subr.bf16.mxu0 0
      %605 = vmatpush1.bf16.msra.mxu0 0
      %606 = vmatprep.mubr.bf16.mxu0 0
      %607 = vmatmul.mubr.bf16.gmra.mrb[0].mxu0 %v499
      %v608 = vpop.f32.mrb[0].mxu0
      %v609 = vadd.f32 %v524, %v608
      %v610 = vpop.f32.mrb[0].mxu0
      %v611 = vpop.f32.mrb[0].mxu0
      %v612 = vadd.f32 %v524, %v611
      %v613 = vpop.f32.mrb[0].mxu0
      %614 = vmatprep.mubr.bf16.mxu0 0
      %615 = vmatmul.mubr.bf16.gmra.mrb[0].mxu0 %v500
      %v616 = vpop.f32.mrb[0].mxu0
      %v617 = vadd.f32 %v524, %v616
      %v618 = vpop.f32.mrb[0].mxu0
      %v619 = vpop.f32.mrb[0].mxu0
      %v620 = vadd.f32 %v524, %v619
      %v621 = vpop.f32.mrb[0].mxu0
      %622 = vmatprep.mubr.bf16.mxu0 0
      %623 = vmatmul.mubr.bf16.gmra.mrb[0].mxu0 %v501
      %v624 = vpop.f32.mrb[0].mxu0
      %v625 = vadd.f32 %v524, %v624
      %v626 = vpop.f32.mrb[0].mxu0
      %v627 = vpop.f32.mrb[0].mxu0
      %v628 = vadd.f32 %v524, %v627
      %v629 = vpop.f32.mrb[0].mxu0
      %630 = vmatprep.mubr.bf16.mxu0 0
      %631 = vmatmul.mubr.bf16.gmra.mrb[0].mxu0 %v502
      %v632 = vpop.f32.mrb[0].mxu0
      %v633 = vadd.f32 %v524, %v632
      %v634 = vpop.f32.mrb[0].mxu0
      %v635 = vpop.f32.mrb[0].mxu0
      %v636 = vadd.f32 %v524, %v635
      %v637 = vpop.f32.mrb[0].mxu0
      %638 = vdwg.mxu0
      %v639 = vpack.c.bf16 %v612, %v609
      %v640 = vpack.c.bf16 %v620, %v617
      %v641 = vpack.c.bf16 %v628, %v625
      %v642 = vpack.c.bf16 %v636, %v633
      %v643 = vld [vmem:[%s5] sm:$0xf]
      %v644 = vld [vmem:[%s5 + $0x4] sm:$0xf]
      %v645 = vld [vmem:[%s6] sm:$0x1]
      %v647 = vlaneseq
      %v648 = vshrl.u32 %v647, 7
      %v649 = vsub.s32 0, %v648
      %v650 = vrot.slane %v645, %v649
      %v654 = vunpack.c.l.b16 %v643
      %v655 = vunpack.c.l.b16 %v644
      %v656 = vpack.c.b16 %v655, %v654
      %vm658 = vcmask 130048
      %v660 = vsel %vm658, %v639, 0
      %v663 = vsel %vm658, %v640, 0
      %v666 = vsel %vm658, %v641, 0
      %v669 = vsel %vm658, %v642, 0
      %671 = vmatprep.subr.bf16.mxu0 0
      %672 = vmatpush1.bf16.msra.mxu0 %v656
      %673 = vmatprep.subr.bf16.mxu0 0
      %674 = vmatpush1.bf16.msra.mxu0 0
      %675 = vmatprep.subr.bf16.mxu0 0
      %676 = vmatpush1.bf16.msra.mxu0 0
      %677 = vmatprep.subr.bf16.mxu0 0
      %678 = vmatpush1.bf16.msra.mxu0 0
      %679 = vmatprep.subr.bf16.mxu0 0
      %680 = vmatpush1.bf16.msra.mxu0 0
      %681 = vmatprep.subr.bf16.mxu0 0
      %682 = vmatpush1.bf16.msra.mxu0 0
      %683 = vmatprep.subr.bf16.mxu0 0
      %684 = vmatpush1.bf16.msra.mxu0 0
      %685 = vmatprep.subr.bf16.mxu0 0
      %686 = vmatpush1.bf16.msra.mxu0 0
      %687 = vmatprep.subr.bf16.mxu0 0
      %688 = vmatpush1.bf16.msra.mxu0 0
      %689 = vmatprep.subr.bf16.mxu0 0
      %690 = vmatpush1.bf16.msra.mxu0 0
      %691 = vmatprep.subr.bf16.mxu0 0
      %692 = vmatpush1.bf16.msra.mxu0 0
      %693 = vmatprep.subr.bf16.mxu0 0
      %694 = vmatpush1.bf16.msra.mxu0 0
      %695 = vmatprep.subr.bf16.mxu0 0
      %696 = vmatpush1.bf16.msra.mxu0 0
      %697 = vmatprep.subr.bf16.mxu0 0
      %698 = vmatpush1.bf16.msra.mxu0 0
      %699 = vmatprep.subr.bf16.mxu0 0
      %700 = vmatpush1.bf16.msra.mxu0 0
      %701 = vmatprep.subr.bf16.mxu0 0
      %702 = vmatpush1.bf16.msra.mxu0 0
      %703 = vmatprep.mubr.bf16.mxu0 0
      %704 = vmatmul.mubr.bf16.gmra.mrb[0].mxu0 %v660
      %v705 = vpop.f32.mrb[0].mxu0
      %v706 = vadd.f32 %v650, %v705
      %v707 = vpop.f32.mrb[0].mxu0
      %v708 = vpop.f32.mrb[0].mxu0
      %v709 = vadd.f32 %v650, %v708
      %v710 = vpop.f32.mrb[0].mxu0
      %711 = vmatprep.mubr.bf16.mxu0 0
      %712 = vmatmul.mubr.bf16.gmra.mrb[0].mxu0 %v663
      %v713 = vpop.f32.mrb[0].mxu0
      %v714 = vadd.f32 %v650, %v713
      %v715 = vpop.f32.mrb[0].mxu0
      %v716 = vpop.f32.mrb[0].mxu0
      %v717 = vadd.f32 %v650, %v716
      %v718 = vpop.f32.mrb[0].mxu0
      %719 = vmatprep.mubr.bf16.mxu0 0
      %720 = vmatmul.mubr.bf16.gmra.mrb[0].mxu0 %v666
      %v721 = vpop.f32.mrb[0].mxu0
      %v722 = vadd.f32 %v650, %v721
      %v723 = vpop.f32.mrb[0].mxu0
      %v724 = vpop.f32.mrb[0].mxu0
      %v725 = vadd.f32 %v650, %v724
      %v726 = vpop.f32.mrb[0].mxu0
      %727 = vmatprep.mubr.bf16.mxu0 0
      %728 = vmatmul.mubr.bf16.gmra.mrb[0].mxu0 %v669
      %v729 = vpop.f32.mrb[0].mxu0
      %v730 = vadd.f32 %v650, %v729
      %v731 = vpop.f32.mrb[0].mxu0
      %v732 = vpop.f32.mrb[0].mxu0
      %v733 = vadd.f32 %v650, %v732
      %v734 = vpop.f32.mrb[0].mxu0
      %735 = vdwg.mxu0
      %v736 = vmax.f32 %v706, 0.0
      %v737 = vmax.f32 %v709, 0.0
      %v738 = vmax.f32 %v714, 0.0
      %v739 = vmax.f32 %v717, 0.0
      %v740 = vmax.f32 %v722, 0.0
      %v741 = vmax.f32 %v725, 0.0
      %v742 = vmax.f32 %v730, 0.0
      %v743 = vmax.f32 %v733, 0.0
      %v744 = vpack.c.bf16 %v737, %v736
      %v745 = vpack.c.bf16 %v739, %v738
      %v746 = vpack.c.bf16 %v741, %v740
      %v747 = vpack.c.bf16 %v743, %v742
      %v748 = vld [vmem:[%s7] sm:$0xf]
      %v749 = vld [vmem:[%s7 + $0x4] sm:$0xf]
      %v750 = vld [vmem:[%s7 + $0x8] sm:$0xf]
      %v751 = vld [vmem:[%s7 + $0xc] sm:$0xf]
      %v752 = vld [vmem:[%s7 + $0x10] sm:$0xf]
      %v753 = vld [vmem:[%s7 + $0x14] sm:$0xf]
      %v754 = vld [vmem:[%s7 + $0x18] sm:$0xf]
      %v755 = vld [vmem:[%s7 + $0x1c] sm:$0xf]
      %v756 = vld [vmem:[%s7 + $0x20] sm:$0xf]
      %v757 = vld [vmem:[%s7 + $0x24] sm:$0xf]
      %v758 = vld [vmem:[%s7 + $0x28] sm:$0xf]
      %v759 = vld [vmem:[%s7 + $0x2c] sm:$0xf]
      %v760 = vld [vmem:[%s7 + $0x30] sm:$0xf]
      %v761 = vld [vmem:[%s7 + $0x34] sm:$0xf]
      %v762 = vld [vmem:[%s7 + $0x38] sm:$0xf]
      %v763 = vld [vmem:[%s7 + $0x3c] sm:$0xf]
      %v764 = vld [vmem:[%s8] sm:$0x1]
      %v766 = vlaneseq
      %v767 = vshrl.u32 %v766, 7
      %v768 = vsub.s32 0, %v767
      %v769 = vrot.slane %v764, %v768
      %v787 = vunpack.c.l.b16 %v748
      %v788 = vunpack.c.l.b16 %v749
      %v789 = vunpack.c.l.b16 %v750
      %v790 = vunpack.c.l.b16 %v751
      %v791 = vunpack.c.l.b16 %v752
      %v792 = vunpack.c.l.b16 %v753
      %v793 = vunpack.c.l.b16 %v754
      %v794 = vunpack.c.l.b16 %v755
      %v795 = vunpack.c.l.b16 %v756
      %v796 = vunpack.c.l.b16 %v757
      %v797 = vunpack.c.l.b16 %v758
      %v798 = vunpack.c.l.b16 %v759
      %v799 = vunpack.c.l.b16 %v760
      %v800 = vunpack.c.l.b16 %v761
      %v801 = vunpack.c.l.b16 %v762
      %v802 = vunpack.c.l.b16 %v763
      %v803 = vpack.c.b16 %v788, %v787
      %v804 = vpack.c.b16 %v790, %v789
      %v805 = vpack.c.b16 %v792, %v791
      %v806 = vpack.c.b16 %v794, %v793
      %v807 = vpack.c.b16 %v796, %v795
      %v808 = vpack.c.b16 %v798, %v797
      %v809 = vpack.c.b16 %v800, %v799
      %v810 = vpack.c.b16 %v802, %v801
      %819 = vmatprep.subr.bf16.mxu0 0
      %820 = vmatpush1.bf16.msra.mxu0 %v803
      %821 = vmatprep.subr.bf16.mxu0 0
      %822 = vmatpush1.bf16.msra.mxu0 %v804
      %823 = vmatprep.subr.bf16.mxu0 0
      %824 = vmatpush1.bf16.msra.mxu0 %v805
      %825 = vmatprep.subr.bf16.mxu0 0
      %826 = vmatpush1.bf16.msra.mxu0 %v806
      %827 = vmatprep.subr.bf16.mxu0 0
      %828 = vmatpush1.bf16.msra.mxu0 %v807
      %829 = vmatprep.subr.bf16.mxu0 0
      %830 = vmatpush1.bf16.msra.mxu0 %v808
      %831 = vmatprep.subr.bf16.mxu0 0
      %832 = vmatpush1.bf16.msra.mxu0 %v809
      %833 = vmatprep.subr.bf16.mxu0 0
      %834 = vmatpush1.bf16.msra.mxu0 %v810
      %835 = vmatprep.subr.bf16.mxu0 0
      %836 = vmatpush1.bf16.msra.mxu0 0
      %837 = vmatprep.subr.bf16.mxu0 0
      %838 = vmatpush1.bf16.msra.mxu0 0
      %839 = vmatprep.subr.bf16.mxu0 0
      %840 = vmatpush1.bf16.msra.mxu0 0
      %841 = vmatprep.subr.bf16.mxu0 0
      %842 = vmatpush1.bf16.msra.mxu0 0
      %843 = vmatprep.subr.bf16.mxu0 0
      %844 = vmatpush1.bf16.msra.mxu0 0
      %845 = vmatprep.subr.bf16.mxu0 0
      %846 = vmatpush1.bf16.msra.mxu0 0
      %847 = vmatprep.subr.bf16.mxu0 0
      %848 = vmatpush1.bf16.msra.mxu0 0
      %849 = vmatprep.subr.bf16.mxu0 0
      %850 = vmatpush1.bf16.msra.mxu0 0
      %851 = vmatprep.mubr.bf16.mxu0 0
      %852 = vmatmul.mubr.bf16.gmra.mrb[0].mxu0 %v744
      %v853 = vpop.f32.mrb[0].mxu0
      %v854 = vadd.f32 %v769, %v853
      %v855 = vpop.f32.mrb[0].mxu0
      %v856 = vpop.f32.mrb[0].mxu0
      %v857 = vadd.f32 %v769, %v856
      %v858 = vpop.f32.mrb[0].mxu0
      %859 = vmatprep.mubr.bf16.mxu0 0
      %860 = vmatmul.mubr.bf16.gmra.mrb[0].mxu0 %v745
      %v861 = vpop.f32.mrb[0].mxu0
      %v862 = vadd.f32 %v769, %v861
      %v863 = vpop.f32.mrb[0].mxu0
      %v864 = vpop.f32.mrb[0].mxu0
      %v865 = vadd.f32 %v769, %v864
      %v866 = vpop.f32.mrb[0].mxu0
      %867 = vmatprep.mubr.bf16.mxu0 0
      %868 = vmatmul.mubr.bf16.gmra.mrb[0].mxu0 %v746
      %v869 = vpop.f32.mrb[0].mxu0
      %v870 = vadd.f32 %v769, %v869
      %v871 = vpop.f32.mrb[0].mxu0
      %v872 = vpop.f32.mrb[0].mxu0
      %v873 = vadd.f32 %v769, %v872
      %v874 = vpop.f32.mrb[0].mxu0
      %875 = vmatprep.mubr.bf16.mxu0 0
      %876 = vmatmul.mubr.bf16.gmra.mrb[0].mxu0 %v747
      %v877 = vpop.f32.mrb[0].mxu0
      %v878 = vadd.f32 %v769, %v877
      %v879 = vpop.f32.mrb[0].mxu0
      %v880 = vpop.f32.mrb[0].mxu0
      %v881 = vadd.f32 %v769, %v880
      %v882 = vpop.f32.mrb[0].mxu0
      %883 = vdwg.mxu0
      %884 = vst.msk [vmem:[%s369] sm:$0xff] %vm413, %v854
      %885 = vst.msk [vmem:[%s369 + $0x8] sm:$0xff] %vm413, %v857
      %886 = vst.msk [vmem:[%s369 + $0x10] sm:$0xff] %vm413, %v862
      %887 = vst.msk [vmem:[%s369 + $0x18] sm:$0xff] %vm413, %v865
      %888 = vst.msk [vmem:[%s369 + $0x20] sm:$0xff] %vm413, %v870
      %889 = vst.msk [vmem:[%s369 + $0x28] sm:$0xff] %vm413, %v873
      %890 = vst.msk [vmem:[%s369 + $0x30] sm:$0xff] %vm413, %v878
      %891 = vst.msk [vmem:[%s369 + $0x38] sm:$0xff] %vm413, %v881
      %892 = vst.msk [vmem:[%s375] sm:$0xff] %vm658, %v609
      %893 = vst.msk [vmem:[%s375 + $0x8] sm:$0xff] %vm658, %v612
      %894 = vst.msk [vmem:[%s375 + $0x10] sm:$0xff] %vm658, %v617
      %895 = vst.msk [vmem:[%s375 + $0x18] sm:$0xff] %vm658, %v620
      %896 = vst.msk [vmem:[%s375 + $0x20] sm:$0xff] %vm658, %v625
      %897 = vst.msk [vmem:[%s375 + $0x28] sm:$0xff] %vm658, %v628
      %898 = vst.msk [vmem:[%s375 + $0x30] sm:$0xff] %vm658, %v633
      %899 = vst.msk [vmem:[%s375 + $0x38] sm:$0xff] %vm658, %v636
      %s900 = smul.u32 8, %s22
      %p901 = scmp.lt.s32.totalorder %s900, 31
      %s902 = scalar_select %p901, %s900, 31
      %s903 = smul.addr %s902, 8
      %s904 = scalar_lea.vmem %s9, %s903
      %s905 = smul.u32 8, %s22
      %p906 = scmp.lt.s32.totalorder %s905, 31
      %s907 = scalar_select %p906, %s905, 31
      %s908 = smul.addr %s907, 8
      %s909 = scalar_lea.vmem %s10, %s908
      // Predicated region
      $region57: #{tpu_custom_call.1} parent=55 // pred_check
        %p910 = pneg %p234
      $region58: #{tpu_custom_call.1} parent=55 // pred_check_branch
        %912 = sbr.rel (%p910) target = $region60
      $region59: #{tpu_custom_call.1} parent=55 // pred_region
        %s913 = smul.u32 8, %s22
      $region60: #{tpu_custom_call.1} parent=55 // pred_fallthru
        _
      // Predicated region
      $region61: #{tpu_custom_call.1} parent=55 // pred_check
        %p914 = pneg %p260
      $region62: #{tpu_custom_call.1} parent=55 // pred_check_branch
        %916 = sbr.rel (%p914) target = $region64
      $region63: #{tpu_custom_call.1} parent=55 // pred_region
        %s917 = smul.u32 8, %s22
      $region64: #{tpu_custom_call.1} parent=55 // pred_fallthru
        _
    $region56: #{tpu_custom_call.1} parent=5 // pred_fallthru
      _
    %p918 = scmp.le.s32.totalorder 2, %s17
    // Predicated region
    $region65: #{tpu_custom_call.1} parent=5 // pred_check
      %p919 = pneg %p918
    $region66: #{tpu_custom_call.1} parent=5 // pred_check_branch
      %921 = sbr.rel (%p919) target = $region68
    $region67: #{tpu_custom_call.1} parent=5 // pred_region
      %s922 = ssub.s32 %s17, 2
      // Predicated region
      $region69: #{tpu_custom_call.1} parent=67 // pred_check
        %p923 = pneg %p240
      $region70: #{tpu_custom_call.1} parent=67 // pred_check_branch
        %925 = sbr.rel (%p923) target = $region72
      $region71: #{tpu_custom_call.1} parent=67 // pred_region
        %s926 = smul.u32 8, %s23
        %p927 = scmp.lt.s32.totalorder %s926, 31
        %s928 = scalar_select %p927, %s926, 31
        %s929 = smul.addr %s928, 8
        %s930 = scalar_lea.vmem %s9, %s929
      $region72: #{tpu_custom_call.1} parent=67 // pred_fallthru
        _
      // Predicated region
      $region73: #{tpu_custom_call.1} parent=67 // pred_check
        %p931 = pneg %p266
      $region74: #{tpu_custom_call.1} parent=67 // pred_check_branch
        %933 = sbr.rel (%p931) target = $region76
      $region75: #{tpu_custom_call.1} parent=67 // pred_region
        %s934 = smul.u32 8, %s23
        %p935 = scmp.lt.s32.totalorder %s934, 31
        %s936 = scalar_select %p935, %s934, 31
        %s937 = smul.addr %s936, 8
        %s938 = scalar_lea.vmem %s10, %s937
      $region76: #{tpu_custom_call.1} parent=67 // pred_fallthru
        _
    $region68: #{tpu_custom_call.1} parent=5 // pred_fallthru
      _
  $region6: #{tpu_custom_call.1} parent=0 // loop_footer
    %s21 = sadd.s32 1, %s17
  $region7: #{tpu_custom_call.1} parent=0 // loop_footer_branch
    %16 = sbr.rel target = $region3
  $region8: #{tpu_custom_call.1} parent=0 // loop_exit
    _

</llo_original>
